<compile_context>
chip_gen: v5e
topology: v5e:2x2
jax: 0.10.0
libtpu: 0.0.40
codegen_flags: <defaults>
</compile_context>

<pallas_src>
import math
import functools

import jax
import jax.numpy as jnp
from jax import lax
from jax.experimental import pallas as pl
from jax.experimental.pallas import tpu as pltpu


def mha_kernel(q_ref, k_ref, v_ref, wq_ref, wk_ref, wv_ref, wo_ref, o_ref,
               acc_ref, *, head_dim: int, compute_dtype):
    h = pl.program_id(2)

    @pl.when(h == 0)
    def _():
        acc_ref[...] = jnp.zeros_like(acc_ref)

    cd = compute_dtype
    exact = (cd == jnp.float32)

    q_in = q_ref[0].astype(cd)        # (TQ, Dq)
    k_in = k_ref[0].astype(cd)        # (S,  Dk)
    v_in = v_ref[0].astype(cd)        # (S,  Dv)
    wq_h = wq_ref[0].astype(cd)       # (Dq, d)   pre-transposed in wrapper
    wk_h = wk_ref[0].astype(cd)       # (Dk, d)
    wv_h = wv_ref[0].astype(cd)       # (Dv, d)
    wo_h = wo_ref[0].astype(cd)       # (d,  H_pad)

    # Per-head projections (nn.Linear, bias=False): x @ W.T done without any
    # in-kernel transpose thanks to the wrapper-side weight layout.
    q_h = jnp.dot(q_in, wq_h, preferred_element_type=jnp.float32)   # (TQ, d) f32
    k_h = jnp.dot(k_in, wk_h, preferred_element_type=jnp.float32)   # (S,  d) f32
    v_h = jnp.dot(v_in, wv_h, preferred_element_type=jnp.float32)   # (S,  d) f32

    # scores = q @ k^T / sqrt(d)   -- contract last dims (no transpose), f32 acc.
    scores = lax.dot_general(
        q_h.astype(cd), k_h.astype(cd),
        dimension_numbers=(((1,), (1,)), ((), ())),
        preferred_element_type=jnp.float32) * (1.0 / math.sqrt(head_dim))

    # Exact reproduction of `scores[scores == 0] = -1e+30`, applied on the f32
    # accumulation result (before any low-precision recast).
    scores = jnp.where(scores == 0.0, jnp.float32(-1e30), scores)

    # softmax along keys (f32 math).
    m = jnp.max(scores, axis=-1, keepdims=True)
    e = jnp.exp(scores - m)
    s = jnp.sum(e, axis=-1, keepdims=True)
    if exact:
        attn = e / s                                    # exact path
    else:
        attn = e * pl.reciprocal(s, approx=True)        # EUP slot, ~free
    # TODO(synk): nn.Dropout is identity in eval mode; training-time dropout not applied.

    head_out = jnp.dot(attn.astype(cd), v_h.astype(cd),
                       preferred_element_type=jnp.float32)          # (TQ, d) f32

    # Output projection contribution of this head: head_out @ Wo[:, h*d:(h+1)*d].T
    acc_ref[...] += jnp.dot(head_out.astype(cd), wo_h,
                            preferred_element_type=jnp.float32)     # (TQ, H_pad)

    @pl.when(h == pl.num_programs(2) - 1)
    def _():
        o_ref[0] = acc_ref[...].astype(o_ref.dtype)


def _pick_query_tile(S: int) -> int:
    # Cap the live (TQ, S) score block independent of S (flash-style tiling is
    # a further step for very long S).  For small S, use the full sequence.
    for tq in (256, 128):
        if S % tq == 0:
            return tq
    return S


def multi_head_attention(queries, keys, values, wq, wk, wv, wo, num_heads,
                         compute_dtype=jnp.bfloat16):
    B, S, Dq = queries.shape
    Dk = keys.shape[-1]
    Dv = values.shape[-1]
    H = wq.shape[0]
    assert H % num_heads == 0
    d = H // num_heads

    TQ = _pick_query_tile(S)
    n_qt = S // TQ

    # Lane-dense output: pad the output feature dim up to a multiple of 128.
    H_pad = ((H + 127) // 128) * 128

    # Wrapper-side weight layout plumbing (done once, outside the kernel):
    #   W (out,in) -> per-head (num_heads, in, d) so the kernel needs no .T.
    wq_t = wq.reshape(num_heads, d, Dq).transpose(0, 2, 1)   # (nh, Dq, d)
    wk_t = wk.reshape(num_heads, d, Dk).transpose(0, 2, 1)   # (nh, Dk, d)
    wv_t = wv.reshape(num_heads, d, Dv).transpose(0, 2, 1)   # (nh, Dv, d)
    wo_t = jnp.pad(wo.T, ((0, 0), (0, H_pad - H)))           # (H, H_pad)
    wo_t = wo_t.reshape(num_heads, d, H_pad)                 # (nh, d, H_pad)

    kernel = functools.partial(mha_kernel, head_dim=d, compute_dtype=compute_dtype)

    out_padded = pl.pallas_call(
        kernel,
        out_shape=jax.ShapeDtypeStruct((B, S, H_pad), jnp.float32),
        grid_spec=pltpu.PrefetchScalarGridSpec(
            num_scalar_prefetch=0,
            # head is the innermost reduction ("arbitrary") axis; output block
            # index is constant along it -> VMEM-resident accumulator.
            grid=(B, n_qt, num_heads),
            in_specs=[
                pl.BlockSpec((1, TQ, Dq), lambda b, t, h: (b, t, 0)),
                pl.BlockSpec((1, S, Dk), lambda b, t, h: (b, 0, 0)),
                pl.BlockSpec((1, S, Dv), lambda b, t, h: (b, 0, 0)),
                pl.BlockSpec((1, Dq, d), lambda b, t, h: (h, 0, 0)),
                pl.BlockSpec((1, Dk, d), lambda b, t, h: (h, 0, 0)),
                pl.BlockSpec((1, Dv, d), lambda b, t, h: (h, 0, 0)),
                pl.BlockSpec((1, d, H_pad), lambda b, t, h: (h, 0, 0)),
            ],
            out_specs=pl.BlockSpec((1, TQ, H_pad), lambda b, t, h: (b, t, 0)),
            scratch_shapes=[pltpu.VMEM((TQ, H_pad), jnp.float32)],
        ),
        compiler_params=pltpu.CompilerParams(
            dimension_semantics=("parallel", "parallel", "arbitrary")),
    )(queries, keys, values, wq_t, wk_t, wv_t, wo_t)

    return out_padded[:, :, :H]


def reference_mha(queries, keys, values, wq, wk, wv, wo, num_heads):
    """Pure-JAX reference mirroring the PyTorch module exactly (true f32 math)."""
    hp = lax.Precision.HIGHEST

    def transpose_qkv(x):
        B, S, H = x.shape
        x = x.reshape(B, S, num_heads, -1).transpose(0, 2, 1, 3)
        return x.reshape(-1, S, x.shape[-1])

    def transpose_output(x):
        BH, S, d = x.shape
        x = x.reshape(-1, num_heads, S, d).transpose(0, 2, 1, 3)
        return x.reshape(x.shape[0], S, -1)

    q = transpose_qkv(jnp.einsum('bsd,hd->bsh', queries, wq, precision=hp))
    k = transpose_qkv(jnp.einsum('bsd,hd->bsh', keys, wk, precision=hp))
    v = transpose_qkv(jnp.einsum('bsd,hd->bsh', values, wv, precision=hp))
    d = q.shape[-1]
    scores = jnp.einsum('bqd,bkd->bqk', q, k, precision=hp) / math.sqrt(d)
    scores = jnp.where(scores == 0.0, -1e30, scores)
    attn = jax.nn.softmax(scores, axis=-1)
    out = jnp.einsum('bqk,bkd->bqd', attn, v, precision=hp)
    return jnp.einsum('bsh,oh->bso', transpose_output(out), wo, precision=hp)


if __name__ == "__main__":
    # Make every f32 matmul (reference einsums, and the kernel dots when running
    # under interpret mode) use true-f32 precision instead of the TPU default
    # single-pass-bf16 — otherwise the "exact" comparison is apples-to-oranges.
    jax.config.update("jax_default_matmul_precision", "highest")

    # Small, forward-consistent shapes.
    B, S = 2, 8
    key_size = query_size = value_size = 32
    num_hiddens = 32
    num_heads = 4

    root = jax.random.PRNGKey(0)
    kq, kk, kv, kwq, kwk, kwv, kwo = jax.random.split(root, 7)

    queries = jax.random.normal(kq, (B, S, query_size), dtype=jnp.float32)
    keys = jax.random.normal(kk, (B, S, key_size), dtype=jnp.float32)
    values = jax.random.normal(kv, (B, S, value_size), dtype=jnp.float32)

    # Deterministic synthetic weights (nn.Linear layout (out_features, in_features), bias=False).
    wq = jax.random.normal(kwq, (num_hiddens, query_size), dtype=jnp.float32) * 0.1
    wk = jax.random.normal(kwk, (num_hiddens, key_size), dtype=jnp.float32) * 0.1
    wv = jax.random.normal(kwv, (num_hiddens, value_size), dtype=jnp.float32) * 0.1
    wo = jax.random.normal(kwo, (num_hiddens, num_hiddens), dtype=jnp.float32) * 0.1

    ref = jax.block_until_ready(
        reference_mha(queries, keys, values, wq, wk, wv, wo, num_heads))

    # Exact-semantics path (f32 matmuls, exact softmax division).
    out_f32 = multi_head_attention(queries, keys, values, wq, wk, wv, wo,
                                   num_heads, compute_dtype=jnp.float32)
    out_f32 = jax.block_until_ready(out_f32)
    assert out_f32.shape == (B, S, num_hiddens)
    assert jnp.allclose(out_f32, ref, atol=1e-3, rtol=1e-3), "f32 mismatch vs reference"

    # Performance path (bf16 MXU inputs, f32 accumulation, approx reciprocal).
    out_bf16 = multi_head_attention(queries, keys, values, wq, wk, wv, wo,
                                    num_heads, compute_dtype=jnp.bfloat16)
    out_bf16 = jax.block_until_ready(out_bf16)
    assert out_bf16.shape == (B, S, num_hiddens)
    assert jnp.allclose(out_bf16, ref, atol=3e-2, rtol=3e-2), "bf16 mismatch vs reference"

    print("KERNEL_OK")
</pallas_src>

<mosaic_0001>
module attributes {stable_mosaic.version = 11 : i64} {
  func.func @mha_kernel(%arg0: i32, %arg1: i32, %arg2: i32, %arg3: memref<1x8x32xf32, #tpu.memory_space<vmem>>, %arg4: memref<1x8x32xf32, #tpu.memory_space<vmem>>, %arg5: memref<1x8x32xf32, #tpu.memory_space<vmem>>, %arg6: memref<1x32x8xf32, #tpu.memory_space<vmem>>, %arg7: memref<1x32x8xf32, #tpu.memory_space<vmem>>, %arg8: memref<1x32x8xf32, #tpu.memory_space<vmem>>, %arg9: memref<1x8x128xf32, #tpu.memory_space<vmem>>, %arg10: memref<1x8x128xf32, #tpu.memory_space<vmem>>, %arg11: memref<8x128xf32, #tpu.memory_space<vmem>>) attributes {dimension_semantics = [#tpu.dimension_semantics<parallel>, #tpu.dimension_semantics<parallel>, #tpu.dimension_semantics<arbitrary>], iteration_bounds = array<i64: 2, 1, 4>, scalar_prefetch = 0 : i64, scratch_operands = 1 : i64, tpu.core_type = #tpu.core_type<tc>, window_params = [{transform_indices = @transform_0, window_bounds = array<i64: 1, 8, 32>}, {transform_indices = @transform_1, window_bounds = array<i64: 1, 8, 32>}, {transform_indices = @transform_2, window_bounds = array<i64: 1, 8, 32>}, {transform_indices = @transform_3, window_bounds = array<i64: 1, 32, 8>}, {transform_indices = @transform_4, window_bounds = array<i64: 1, 32, 8>}, {transform_indices = @transform_5, window_bounds = array<i64: 1, 32, 8>}, {transform_indices = @transform_6, window_bounds = array<i64: 1, 8, 128>}, {transform_indices = @transform_7, window_bounds = array<i64: 1, 8, 128>}]} {
    %c0_i32 = arith.constant 0 : i32
    %0 = arith.cmpi eq, %arg2, %c0_i32 : i32
    %1 = arith.extui %0 : i1 to i32
    %c0_i32_0 = arith.constant 0 : i32
    %2 = arith.cmpi ne, %1, %c0_i32_0 : i32
    scf.if %2 {
      %cst_36 = arith.constant 0.000000e+00 : f32
      %44 = vector.broadcast %cst_36 : f32 to vector<8x128xf32>
      %c0_37 = arith.constant 0 : index
      %c0_38 = arith.constant 0 : index
      %45 = vector.load %arg11[%c0_37, %c0_38] : memref<8x128xf32, #tpu.memory_space<vmem>>, vector<8x128xf32>
      tpu.vector_store %arg11[%c0_37, %c0_38], %44 {strides = array<i32>} : memref<8x128xf32, #tpu.memory_space<vmem>>, vector<8x128xf32>,
    } else {
    }
    %c0 = arith.constant 0 : index
    %c0_1 = arith.constant 0 : index
    %c0_2 = arith.constant 0 : index
    %3 = vector.load %arg3[%c0, %c0_1, %c0_2] : memref<1x8x32xf32, #tpu.memory_space<vmem>>, vector<1x8x32xf32>
    %4 = vector.shape_cast %3 : vector<1x8x32xf32> to vector<8x32xf32>
    %c0_3 = arith.constant 0 : index
    %c0_4 = arith.constant 0 : index
    %c0_5 = arith.constant 0 : index
    %5 = vector.load %arg4[%c0_3, %c0_4, %c0_5] : memref<1x8x32xf32, #tpu.memory_space<vmem>>, vector<1x8x32xf32>
    %6 = vector.shape_cast %5 : vector<1x8x32xf32> to vector<8x32xf32>
    %c0_6 = arith.constant 0 : index
    %c0_7 = arith.constant 0 : index
    %c0_8 = arith.constant 0 : index
    %7 = vector.load %arg5[%c0_6, %c0_7, %c0_8] : memref<1x8x32xf32, #tpu.memory_space<vmem>>, vector<1x8x32xf32>
    %8 = vector.shape_cast %7 : vector<1x8x32xf32> to vector<8x32xf32>
    %c0_9 = arith.constant 0 : index
    %c0_10 = arith.constant 0 : index
    %c0_11 = arith.constant 0 : index
    %9 = vector.load %arg6[%c0_9, %c0_10, %c0_11] : memref<1x32x8xf32, #tpu.memory_space<vmem>>, vector<1x32x8xf32>
    %10 = vector.shape_cast %9 : vector<1x32x8xf32> to vector<32x8xf32>
    %c0_12 = arith.constant 0 : index
    %c0_13 = arith.constant 0 : index
    %c0_14 = arith.constant 0 : index
    %11 = vector.load %arg7[%c0_12, %c0_13, %c0_14] : memref<1x32x8xf32, #tpu.memory_space<vmem>>, vector<1x32x8xf32>
    %12 = vector.shape_cast %11 : vector<1x32x8xf32> to vector<32x8xf32>
    %c0_15 = arith.constant 0 : index
    %c0_16 = arith.constant 0 : index
    %c0_17 = arith.constant 0 : index
    %13 = vector.load %arg8[%c0_15, %c0_16, %c0_17] : memref<1x32x8xf32, #tpu.memory_space<vmem>>, vector<1x32x8xf32>
    %14 = vector.shape_cast %13 : vector<1x32x8xf32> to vector<32x8xf32>
    %c0_18 = arith.constant 0 : index
    %c0_19 = arith.constant 0 : index
    %c0_20 = arith.constant 0 : index
    %15 = vector.load %arg9[%c0_18, %c0_19, %c0_20] : memref<1x8x128xf32, #tpu.memory_space<vmem>>, vector<1x8x128xf32>
    %16 = vector.shape_cast %15 : vector<1x8x128xf32> to vector<8x128xf32>
    %cst = arith.constant dense<0.000000e+00> : vector<8x8xf32>
    %17 = tpu.matmul %4, %10, %cst {dimension_numbers = #tpu.dot_dimension_numbers<[1], [0], [0], [1], [0, 0, 1, 1], [], []>, precision = #tpu.contract_precision<fp32>} : vector<8x32xf32>, vector<32x8xf32>, vector<8x8xf32> -> vector<8x8xf32>
    %cst_21 = arith.constant dense<0.000000e+00> : vector<8x8xf32>
    %18 = tpu.matmul %6, %12, %cst_21 {dimension_numbers = #tpu.dot_dimension_numbers<[1], [0], [0], [1], [0, 0, 1, 1], [], []>, precision = #tpu.contract_precision<fp32>} : vector<8x32xf32>, vector<32x8xf32>, vector<8x8xf32> -> vector<8x8xf32>
    %cst_22 = arith.constant dense<0.000000e+00> : vector<8x8xf32>
    %19 = tpu.matmul %8, %14, %cst_22 {dimension_numbers = #tpu.dot_dimension_numbers<[1], [0], [0], [1], [0, 0, 1, 1], [], []>, precision = #tpu.contract_precision<fp32>} : vector<8x32xf32>, vector<32x8xf32>, vector<8x8xf32> -> vector<8x8xf32>
    %cst_23 = arith.constant dense<0.000000e+00> : vector<8x8xf32>
    %20 = tpu.matmul %17, %18, %cst_23 {dimension_numbers = #tpu.dot_dimension_numbers<[1], [1], [0], [0], [0, 0, 1, 0], [], []>, precision = #tpu.contract_precision<fp32>} : vector<8x8xf32>, vector<8x8xf32>, vector<8x8xf32> -> vector<8x8xf32>
    %cst_24 = arith.constant 0.353553385 : f32
    %21 = vector.broadcast %cst_24 : f32 to vector<8x8xf32>
    %22 = arith.mulf %20, %21 : vector<8x8xf32>
    %cst_25 = arith.constant 0.000000e+00 : f32
    %23 = vector.broadcast %cst_25 : f32 to vector<8x8xf32>
    %24 = arith.cmpf oeq, %22, %23 : vector<8x8xf32>
    %cst_26 = arith.constant -1.000000e+30 : f32
    %25 = vector.broadcast %cst_26 : f32 to vector<8x8xf32>
    %26 = arith.select %24, %25, %22 : vector<8x8xi1>, vector<8x8xf32>
    %cst_27 = arith.constant dense<0xFF800000> : vector<8xf32>
    %27 = vector.multi_reduction <maximumf>, %26, %cst_27 [1] : vector<8x8xf32> to vector<8xf32>
    %28 = vector.shape_cast %27 : vector<8xf32> to vector<8x1xf32>
    %29 = vector.broadcast %28 : vector<8x1xf32> to vector<8x8xf32>
    %30 = arith.subf %26, %29 : vector<8x8xf32>
    %31 = math.exp %30 : vector<8x8xf32>
    %cst_28 = arith.constant dense<0.000000e+00> : vector<8xf32>
    %32 = vector.multi_reduction <add>, %31, %cst_28 [1] : vector<8x8xf32> to vector<8xf32>
    %33 = vector.shape_cast %32 : vector<8xf32> to vector<8x1xf32>
    %34 = vector.broadcast %33 : vector<8x1xf32> to vector<8x8xf32>
    %35 = arith.divf %31, %34 : vector<8x8xf32>
    %cst_29 = arith.constant dense<0.000000e+00> : vector<8x8xf32>
    %36 = tpu.matmul %35, %19, %cst_29 {dimension_numbers = #tpu.dot_dimension_numbers<[1], [0], [0], [1], [0, 0, 1, 1], [], []>, precision = #tpu.contract_precision<fp32>} : vector<8x8xf32>, vector<8x8xf32>, vector<8x8xf32> -> vector<8x8xf32>
    %c0_30 = arith.constant 0 : index
    %c0_31 = arith.constant 0 : index
    %37 = vector.load %arg11[%c0_30, %c0_31] : memref<8x128xf32, #tpu.memory_space<vmem>>, vector<8x128xf32>
    %cst_32 = arith.constant dense<0.000000e+00> : vector<8x128xf32>
    %38 = tpu.matmul %36, %16, %cst_32 {dimension_numbers = #tpu.dot_dimension_numbers<[1], [0], [0], [1], [0, 0, 1, 1], [], []>, precision = #tpu.contract_precision<fp32>} : vector<8x8xf32>, vector<8x128xf32>, vector<8x128xf32> -> vector<8x128xf32>
    %39 = arith.addf %37, %38 : vector<8x128xf32>
    %c0_33 = arith.constant 0 : index
    %c0_34 = arith.constant 0 : index
    %40 = vector.load %arg11[%c0_33, %c0_34] : memref<8x128xf32, #tpu.memory_space<vmem>>, vector<8x128xf32>
    tpu.vector_store %arg11[%c0_33, %c0_34], %39 {strides = array<i32>} : memref<8x128xf32, #tpu.memory_space<vmem>>, vector<8x128xf32>,
    %c3_i32 = arith.constant 3 : i32
    %41 = arith.cmpi eq, %arg2, %c3_i32 : i32
    %42 = arith.extui %41 : i1 to i32
    %c0_i32_35 = arith.constant 0 : i32
    %43 = arith.cmpi ne, %42, %c0_i32_35 : i32
    scf.if %43 {
      %c0_36 = arith.constant 0 : index
      %c0_37 = arith.constant 0 : index
      %44 = vector.load %arg11[%c0_36, %c0_37] : memref<8x128xf32, #tpu.memory_space<vmem>>, vector<8x128xf32>
      %c0_38 = arith.constant 0 : index
      %c0_39 = arith.constant 0 : index
      %c0_40 = arith.constant 0 : index
      %45 = vector.load %arg10[%c0_38, %c0_39, %c0_40] : memref<1x8x128xf32, #tpu.memory_space<vmem>>, vector<1x8x128xf32>
      %46 = vector.shape_cast %45 : vector<1x8x128xf32> to vector<8x128xf32>
      %47 = vector.shape_cast %44 : vector<8x128xf32> to vector<1x8x128xf32>
      tpu.vector_store %arg10[%c0_38, %c0_39, %c0_40], %47 {strides = array<i32>} : memref<1x8x128xf32, #tpu.memory_space<vmem>>, vector<1x8x128xf32>,
    } else {
    }
    return
  }
  func.func @transform_0(%arg0: i32, %arg1: i32, %arg2: i32) -> (i32, i32, i32) {
    %c0_i32 = arith.constant 0 : i32
    %c0_i32_0 = arith.constant 0 : i32
    return %arg0, %arg1, %c0_i32 : i32, i32, i32
  }
  func.func @transform_1(%arg0: i32, %arg1: i32, %arg2: i32) -> (i32, i32, i32) {
    %c0_i32 = arith.constant 0 : i32
    %c0_i32_0 = arith.constant 0 : i32
    %c0_i32_1 = arith.constant 0 : i32
    return %arg0, %c0_i32, %c0_i32_0 : i32, i32, i32
  }
  func.func @transform_2(%arg0: i32, %arg1: i32, %arg2: i32) -> (i32, i32, i32) {
    %c0_i32 = arith.constant 0 : i32
    %c0_i32_0 = arith.constant 0 : i32
    %c0_i32_1 = arith.constant 0 : i32
    return %arg0, %c0_i32, %c0_i32_0 : i32, i32, i32
  }
  func.func @transform_3(%arg0: i32, %arg1: i32, %arg2: i32) -> (i32, i32, i32) {
    %c0_i32 = arith.constant 0 : i32
    %c0_i32_0 = arith.constant 0 : i32
    %c0_i32_1 = arith.constant 0 : i32
    return %arg2, %c0_i32, %c0_i32_0 : i32, i32, i32
  }
  func.func @transform_4(%arg0: i32, %arg1: i32, %arg2: i32) -> (i32, i32, i32) {
    %c0_i32 = arith.constant 0 : i32
    %c0_i32_0 = arith.constant 0 : i32
    %c0_i32_1 = arith.constant 0 : i32
    return %arg2, %c0_i32, %c0_i32_0 : i32, i32, i32
  }
  func.func @transform_5(%arg0: i32, %arg1: i32, %arg2: i32) -> (i32, i32, i32) {
    %c0_i32 = arith.constant 0 : i32
    %c0_i32_0 = arith.constant 0 : i32
    %c0_i32_1 = arith.constant 0 : i32
    return %arg2, %c0_i32, %c0_i32_0 : i32, i32, i32
  }
  func.func @transform_6(%arg0: i32, %arg1: i32, %arg2: i32) -> (i32, i32, i32) {
    %c0_i32 = arith.constant 0 : i32
    %c0_i32_0 = arith.constant 0 : i32
    %c0_i32_1 = arith.constant 0 : i32
    return %arg2, %c0_i32, %c0_i32_0 : i32, i32, i32
  }
  func.func @transform_7(%arg0: i32, %arg1: i32, %arg2: i32) -> (i32, i32, i32) {
    %c0_i32 = arith.constant 0 : i32
    %c0_i32_0 = arith.constant 0 : i32
    return %arg0, %arg1, %c0_i32 : i32, i32, i32
  }
}

</mosaic_0001>

<llo_original>
// kernel: tpu_custom_call.1
$region0: #{tpu_custom_call.1}
  #allocation0 [shape = 'u32[]', space=smem, size = 0x4, offset = 0x4, fixed_abs, tag = 'smem constant byte address 0x4 - core index']
  #allocation1 [shape = 'u32[72,128]{1,0:T(1,128)}', space=vmem, size = 0x9000, scoped, tag = 'internal scratch']
  #allocation2 [shape = 'f32[8,128]{1,0:T(8,128)}', space=vmem, size = 0x1000, scoped, tag = 'scratch operand']
  %s0 = inlined_call_operand.vmem [shape: f32[2,8,32], index: 0, kind: input, shape index: {}]
  %s1 = inlined_call_operand.vmem [shape: f32[2,8,32], index: 1, kind: input, shape index: {}]
  %s2 = inlined_call_operand.vmem [shape: f32[2,8,32], index: 2, kind: input, shape index: {}]
  %s3 = inlined_call_operand.vmem [shape: f32[4,32,8], index: 3, kind: input, shape index: {}]
  %s4 = inlined_call_operand.vmem [shape: f32[4,32,8], index: 4, kind: input, shape index: {}]
  %s5 = inlined_call_operand.vmem [shape: f32[4,32,8], index: 5, kind: input, shape index: {}]
  %s6 = inlined_call_operand.vmem [shape: f32[4,8,128], index: 6, kind: input, shape index: {}]
  %s7 = inlined_call_operand.hbm [shape: f32[2,8,128], index: 7, kind: output, shape index: {}]
  %s8 = sld [smem:[#allocation0]]
  $region69: #{tpu_custom_call.1} parent=0
    _
  %s10 = ssub.s32 1, %s8
  %s11 = scalar_select 0, %s10, %s8
  $region1: #{tpu_custom_call.1} parent=0
    #allocation3 [shape = 'u8[8192]{0}', space=vmem, size = 0x2000, scoped, tag = 'output window, operand 0']
    #allocation4 [shape = 's32[2]{0}', space=sflag, size = 0x8, scoped, tag = 'scoped memory for tpu_custom_call.1']
    %12 = vsyncpa [#allocation4], 0
    %s13 = scalar_lea.sflag [#allocation4], 1
    %14 = vsyncpa %s13, 0
    loop: start=0, step=1, limit=10
    $region2: #{tpu_custom_call.1} parent=1 // loop_pre_header
      _
    $region3: #{tpu_custom_call.1} parent=1 // loop_header
      %s16 = sphi 0, %s20
      %p17 = scmp.ge.s32.totalorder %s16, 10
      %s23 = sphi 0, %s42
      %s24 = sphi 0, %s38
      %s25 = sphi 0, %s34
      %s26 = sphi 0, %s23
      %s27 = sphi 0, %s24
      %s28 = sphi 0, %s25
      %s29 = sphi 0, %s26
      %s30 = sphi 0, %s27
      %s31 = sphi 0, %s28
      %s47 = sphi 0, %s49
      %s50 = sphi 0, %s47
      %s51 = sphi 0, %s50
      %s67 = sphi 0, %s51
      %s73 = sphi 0, %s75
      %s76 = sphi 0, %s73
      %s77 = sphi 0, %s76
      %s93 = sphi 0, %s77
      %s99 = sphi 0, %s101
      %s102 = sphi 0, %s99
      %s103 = sphi 0, %s102
      %s119 = sphi 0, %s103
      %s125 = sphi 0, %s127
      %s128 = sphi 0, %s125
      %s129 = sphi 0, %s128
      %s145 = sphi 0, %s129
      %s151 = sphi 0, %s153
      %s154 = sphi 0, %s151
      %s155 = sphi 0, %s154
      %s171 = sphi 0, %s155
      %s177 = sphi 0, %s179
      %s180 = sphi 0, %s177
      %s181 = sphi 0, %s180
      %s197 = sphi 0, %s181
      %s203 = sphi 0, %s205
      %s206 = sphi 0, %s203
      %s207 = sphi 0, %s206
      %s223 = sphi 0, %s207
      %s231 = sphi 0, %s233
      %s234 = sphi 0, %s231
      %s235 = sphi 0, %s234
      %s251 = sphi 0, %s235
    $region4: #{tpu_custom_call.1} parent=1 // loop_header_branch
      %19 = sbr.rel (%p17) target = $region8
    $region5: #{tpu_custom_call.1} parent=1 // loop_body
      %s21 = ssub.s32 %s16, 1
      %s22 = ssub.s32 %s16, 2
      %s32 = sadd.s32 1, %s25
      %p33 = scmp.ge.s32.totalorder %s32, 4
      %s34 = scalar_select %p33, 0, %s32
      %s35 = sadd.s32 1, %s24
      %s36 = scalar_select %p33, %s35, %s24
      %p37 = scmp.ge.s32.totalorder %s36, 1
      %s38 = scalar_select %p37, 0, %s36
      %s39 = sadd.s32 1, %s23
      %s40 = scalar_select %p37, %s39, %s23
      %p41 = scmp.ge.s32.totalorder %s40, 2
      %s42 = scalar_select %p41, 0, %s40
      %s43 = ssub.s32 %s23, %s42
      %s44 = ssub.s32 %s24, %s38
      %s45 = sor.u32 %s43, %s44
      %p46 = scmp.eq.s32.totalorder %s45, 0
      %s48 = sadd.s32 %s47, 1
      %s49 = scalar_select %p46, %s47, %s48
      %p52 = pneg %p46
      %p53 = scmp.eq.s32.totalorder %s16, 7
      %p54 = por %p52, %p53
      %p55 = scmp.ne.s32.totalorder %s47, %s50
      %p56 = scmp.eq.s32.totalorder %s16, 0
      %p57 = por %p55, %p56
      %p58 = scmp.ne.s32.totalorder %s47, %s50
      %p59 = scmp.eq.s32.totalorder %s21, 7
      %p60 = por %p58, %p59
      %p61 = scmp.ne.s32.totalorder %s50, %s51
      %p62 = scmp.eq.s32.totalorder %s21, 0
      %p63 = por %p61, %p62
      %p64 = scmp.ne.s32.totalorder %s50, %s51
      %p65 = scmp.eq.s32.totalorder %s22, 7
      %p66 = por %p64, %p65
      %p68 = scmp.ne.s32.totalorder %s51, %s67
      %p69 = scmp.eq.s32.totalorder %s22, 0
      %p70 = por %p68, %p69
      %s71 = ssub.s32 %s23, %s42
      %p72 = scmp.eq.s32.totalorder %s71, 0
      %s74 = sadd.s32 %s73, 1
      %s75 = scalar_select %p72, %s73, %s74
      %p78 = pneg %p72
      %p79 = scmp.eq.s32.totalorder %s16, 7
      %p80 = por %p78, %p79
      %p81 = scmp.ne.s32.totalorder %s73, %s76
      %p82 = scmp.eq.s32.totalorder %s16, 0
      %p83 = por %p81, %p82
      %p84 = scmp.ne.s32.totalorder %s73, %s76
      %p85 = scmp.eq.s32.totalorder %s21, 7
      %p86 = por %p84, %p85
      %p87 = scmp.ne.s32.totalorder %s76, %s77
      %p88 = scmp.eq.s32.totalorder %s21, 0
      %p89 = por %p87, %p88
      %p90 = scmp.ne.s32.totalorder %s76, %s77
      %p91 = scmp.eq.s32.totalorder %s22, 7
      %p92 = por %p90, %p91
      %p94 = scmp.ne.s32.totalorder %s77, %s93
      %p95 = scmp.eq.s32.totalorder %s22, 0
      %p96 = por %p94, %p95
      %s97 = ssub.s32 %s23, %s42
      %p98 = scmp.eq.s32.totalorder %s97, 0
      %s100 = sadd.s32 %s99, 1
      %s101 = scalar_select %p98, %s99, %s100
      %p104 = pneg %p98
      %p105 = scmp.eq.s32.totalorder %s16, 7
      %p106 = por %p104, %p105
      %p107 = scmp.ne.s32.totalorder %s99, %s102
      %p108 = scmp.eq.s32.totalorder %s16, 0
      %p109 = por %p107, %p108
      %p110 = scmp.ne.s32.totalorder %s99, %s102
      %p111 = scmp.eq.s32.totalorder %s21, 7
      %p112 = por %p110, %p111
      %p113 = scmp.ne.s32.totalorder %s102, %s103
      %p114 = scmp.eq.s32.totalorder %s21, 0
      %p115 = por %p113, %p114
      %p116 = scmp.ne.s32.totalorder %s102, %s103
      %p117 = scmp.eq.s32.totalorder %s22, 7
      %p118 = por %p116, %p117
      %p120 = scmp.ne.s32.totalorder %s103, %s119
      %p121 = scmp.eq.s32.totalorder %s22, 0
      %p122 = por %p120, %p121
      %s123 = ssub.s32 %s25, %s34
      %p124 = scmp.eq.s32.totalorder %s123, 0
      %s126 = sadd.s32 %s125, 1
      %s127 = scalar_select %p124, %s125, %s126
      %p130 = pneg %p124
      %p131 = scmp.eq.s32.totalorder %s16, 7
      %p132 = por %p130, %p131
      %p133 = scmp.ne.s32.totalorder %s125, %s128
      %p134 = scmp.eq.s32.totalorder %s16, 0
      %p135 = por %p133, %p134
      %p136 = scmp.ne.s32.totalorder %s125, %s128
      %p137 = scmp.eq.s32.totalorder %s21, 7
      %p138 = por %p136, %p137
      %p139 = scmp.ne.s32.totalorder %s128, %s129
      %p140 = scmp.eq.s32.totalorder %s21, 0
      %p141 = por %p139, %p140
      %p142 = scmp.ne.s32.totalorder %s128, %s129
      %p143 = scmp.eq.s32.totalorder %s22, 7
      %p144 = por %p142, %p143
      %p146 = scmp.ne.s32.totalorder %s129, %s145
      %p147 = scmp.eq.s32.totalorder %s22, 0
      %p148 = por %p146, %p147
      %s149 = ssub.s32 %s25, %s34
      %p150 = scmp.eq.s32.totalorder %s149, 0
      %s152 = sadd.s32 %s151, 1
      %s153 = scalar_select %p150, %s151, %s152
      %p156 = pneg %p150
      %p157 = scmp.eq.s32.totalorder %s16, 7
      %p158 = por %p156, %p157
      %p159 = scmp.ne.s32.totalorder %s151, %s154
      %p160 = scmp.eq.s32.totalorder %s16, 0
      %p161 = por %p159, %p160
      %p162 = scmp.ne.s32.totalorder %s151, %s154
      %p163 = scmp.eq.s32.totalorder %s21, 7
      %p164 = por %p162, %p163
      %p165 = scmp.ne.s32.totalorder %s154, %s155
      %p166 = scmp.eq.s32.totalorder %s21, 0
      %p167 = por %p165, %p166
      %p168 = scmp.ne.s32.totalorder %s154, %s155
      %p169 = scmp.eq.s32.totalorder %s22, 7
      %p170 = por %p168, %p169
      %p172 = scmp.ne.s32.totalorder %s155, %s171
      %p173 = scmp.eq.s32.totalorder %s22, 0
      %p174 = por %p172, %p173
      %s175 = ssub.s32 %s25, %s34
      %p176 = scmp.eq.s32.totalorder %s175, 0
      %s178 = sadd.s32 %s177, 1
      %s179 = scalar_select %p176, %s177, %s178
      %p182 = pneg %p176
      %p183 = scmp.eq.s32.totalorder %s16, 7
      %p184 = por %p182, %p183
      %p185 = scmp.ne.s32.totalorder %s177, %s180
      %p186 = scmp.eq.s32.totalorder %s16, 0
      %p187 = por %p185, %p186
      %p188 = scmp.ne.s32.totalorder %s177, %s180
      %p189 = scmp.eq.s32.totalorder %s21, 7
      %p190 = por %p188, %p189
      %p191 = scmp.ne.s32.totalorder %s180, %s181
      %p192 = scmp.eq.s32.totalorder %s21, 0
      %p193 = por %p191, %p192
      %p194 = scmp.ne.s32.totalorder %s180, %s181
      %p195 = scmp.eq.s32.totalorder %s22, 7
      %p196 = por %p194, %p195
      %p198 = scmp.ne.s32.totalorder %s181, %s197
      %p199 = scmp.eq.s32.totalorder %s22, 0
      %p200 = por %p198, %p199
      %s201 = ssub.s32 %s25, %s34
      %p202 = scmp.eq.s32.totalorder %s201, 0
      %s204 = sadd.s32 %s203, 1
      %s205 = scalar_select %p202, %s203, %s204
      %p208 = pneg %p202
      %p209 = scmp.eq.s32.totalorder %s16, 7
      %p210 = por %p208, %p209
      %p211 = scmp.ne.s32.totalorder %s203, %s206
      %p212 = scmp.eq.s32.totalorder %s16, 0
      %p213 = por %p211, %p212
      %p214 = scmp.ne.s32.totalorder %s203, %s206
      %p215 = scmp.eq.s32.totalorder %s21, 7
      %p216 = por %p214, %p215
      %p217 = scmp.ne.s32.totalorder %s206, %s207
      %p218 = scmp.eq.s32.totalorder %s21, 0
      %p219 = por %p217, %p218
      %p220 = scmp.ne.s32.totalorder %s206, %s207
      %p221 = scmp.eq.s32.totalorder %s22, 7
      %p222 = por %p220, %p221
      %p224 = scmp.ne.s32.totalorder %s207, %s223
      %p225 = scmp.eq.s32.totalorder %s22, 0
      %p226 = por %p224, %p225
      %s227 = ssub.s32 %s23, %s42
      %s228 = ssub.s32 %s24, %s38
      %s229 = sor.u32 %s227, %s228
      %p230 = scmp.eq.s32.totalorder %s229, 0
      %s232 = sadd.s32 %s231, 1
      %s233 = scalar_select %p230, %s231, %s232
      %p236 = pneg %p230
      %p237 = scmp.eq.s32.totalorder %s16, 7
      %p238 = por %p236, %p237
      %p239 = scmp.ne.s32.totalorder %s231, %s234
      %p240 = scmp.eq.s32.totalorder %s16, 0
      %p241 = por %p239, %p240
      %p242 = scmp.ne.s32.totalorder %s231, %s234
      %p243 = scmp.eq.s32.totalorder %s21, 7
      %p244 = por %p242, %p243
      %p245 = scmp.ne.s32.totalorder %s234, %s235
      %p246 = scmp.eq.s32.totalorder %s21, 0
      %p247 = por %p245, %p246
      %p248 = scmp.ne.s32.totalorder %s234, %s235
      %p249 = scmp.eq.s32.totalorder %s22, 7
      %p250 = por %p248, %p249
      %p252 = scmp.ne.s32.totalorder %s235, %s251
      %p253 = scmp.eq.s32.totalorder %s22, 0
      %p254 = por %p252, %p253
      %p255 = scmp.le.s32.totalorder 1, %s16
      %p256 = scmp.lt.s32.totalorder %s16, 9
      %p257 = pnand %p255, %p256
      %p258 = pneg %p257
      // Predicated region
      $region9: #{tpu_custom_call.1} parent=5 // pred_check
        _
      $region10: #{tpu_custom_call.1} parent=5 // pred_check_branch
        %260 = sbr.rel (%p257) target = $region12
      $region11: #{tpu_custom_call.1} parent=5 // pred_region
        %s261 = ssub.s32 %s16, 1
      $region12: #{tpu_custom_call.1} parent=5 // pred_fallthru
        _
      %p262 = scmp.lt.s32.totalorder %s16, 8
      // Predicated region
      $region13: #{tpu_custom_call.1} parent=5 // pred_check
        %p263 = pneg %p262
      $region14: #{tpu_custom_call.1} parent=5 // pred_check_branch
        %265 = sbr.rel (%p263) target = $region16
      $region15: #{tpu_custom_call.1} parent=5 // pred_region
        // Predicated region
        $region17: #{tpu_custom_call.1} parent=15 // pred_check
          %p266 = pneg %p57
        $region18: #{tpu_custom_call.1} parent=15 // pred_check_branch
          %268 = sbr.rel (%p266) target = $region20
        $region19: #{tpu_custom_call.1} parent=15 // pred_region
          %p269 = scmp.lt.s32.totalorder %s23, 1
          %s270 = scalar_select %p269, %s23, 1
          %p271 = scmp.lt.s32.totalorder %s24, 0
          %s272 = scalar_select %p271, %s24, 0
          %s273 = sadd.s32 %s272, %s270
          %s274 = smul.addr %s273, 8
          %s275 = scalar_lea.vmem %s0, %s274
        $region20: #{tpu_custom_call.1} parent=15 // pred_fallthru
          _
        // Predicated region
        $region21: #{tpu_custom_call.1} parent=15 // pred_check
          %p276 = pneg %p83
        $region22: #{tpu_custom_call.1} parent=15 // pred_check_branch
          %278 = sbr.rel (%p276) target = $region24
        $region23: #{tpu_custom_call.1} parent=15 // pred_region
          %p279 = scmp.lt.s32.totalorder %s23, 1
          %s280 = scalar_select %p279, %s23, 1
          %s281 = smul.addr %s280, 8
          %s282 = scalar_lea.vmem %s1, %s281
        $region24: #{tpu_custom_call.1} parent=15 // pred_fallthru
          _
        // Predicated region
        $region25: #{tpu_custom_call.1} parent=15 // pred_check
          %p283 = pneg %p109
        $region26: #{tpu_custom_call.1} parent=15 // pred_check_branch
          %285 = sbr.rel (%p283) target = $region28
        $region27: #{tpu_custom_call.1} parent=15 // pred_region
          %p286 = scmp.lt.s32.totalorder %s23, 1
          %s287 = scalar_select %p286, %s23, 1
          %s288 = smul.addr %s287, 8
          %s289 = scalar_lea.vmem %s2, %s288
        $region28: #{tpu_custom_call.1} parent=15 // pred_fallthru
          _
        // Predicated region
        $region29: #{tpu_custom_call.1} parent=15 // pred_check
          %p290 = pneg %p135
        $region30: #{tpu_custom_call.1} parent=15 // pred_check_branch
          %292 = sbr.rel (%p290) target = $region32
        $region31: #{tpu_custom_call.1} parent=15 // pred_region
          %p293 = scmp.lt.s32.totalorder %s25, 3
          %s294 = scalar_select %p293, %s25, 3
          %s295 = smul.addr %s294, 4
          %s296 = smul.addr %s295, 8
          %s297 = scalar_lea.vmem %s3, %s296
        $region32: #{tpu_custom_call.1} parent=15 // pred_fallthru
          _
        // Predicated region
        $region33: #{tpu_custom_call.1} parent=15 // pred_check
          %p298 = pneg %p161
        $region34: #{tpu_custom_call.1} parent=15 // pred_check_branch
          %300 = sbr.rel (%p298) target = $region36
        $region35: #{tpu_custom_call.1} parent=15 // pred_region
          %p301 = scmp.lt.s32.totalorder %s25, 3
          %s302 = scalar_select %p301, %s25, 3
          %s303 = smul.addr %s302, 4
          %s304 = smul.addr %s303, 8
          %s305 = scalar_lea.vmem %s4, %s304
        $region36: #{tpu_custom_call.1} parent=15 // pred_fallthru
          _
        // Predicated region
        $region37: #{tpu_custom_call.1} parent=15 // pred_check
          %p306 = pneg %p187
        $region38: #{tpu_custom_call.1} parent=15 // pred_check_branch
          %308 = sbr.rel (%p306) target = $region40
        $region39: #{tpu_custom_call.1} parent=15 // pred_region
          %p309 = scmp.lt.s32.totalorder %s25, 3
          %s310 = scalar_select %p309, %s25, 3
          %s311 = smul.addr %s310, 4
          %s312 = smul.addr %s311, 8
          %s313 = scalar_lea.vmem %s5, %s312
        $region40: #{tpu_custom_call.1} parent=15 // pred_fallthru
          _
        // Predicated region
        $region41: #{tpu_custom_call.1} parent=15 // pred_check
          %p314 = pneg %p213
        $region42: #{tpu_custom_call.1} parent=15 // pred_check_branch
          %316 = sbr.rel (%p314) target = $region44
        $region43: #{tpu_custom_call.1} parent=15 // pred_region
          %p317 = scmp.lt.s32.totalorder %s25, 3
          %s318 = scalar_select %p317, %s25, 3
          %s319 = smul.addr %s318, 8
          %s320 = scalar_lea.vmem %s6, %s319
        $region44: #{tpu_custom_call.1} parent=15 // pred_fallthru
          _
      $region16: #{tpu_custom_call.1} parent=5 // pred_fallthru
        _
      %p321 = scmp.le.s32.totalorder 1, %s16
      %p322 = scmp.lt.s32.totalorder %s16, 9
      %p323 = pnand %p321, %p322
      %p324 = pneg %p323
      // Predicated region
      $region45: #{tpu_custom_call.1} parent=5 // pred_check
        _
      $region46: #{tpu_custom_call.1} parent=5 // pred_check_branch
        %326 = sbr.rel (%p323) target = $region48
      $region47: #{tpu_custom_call.1} parent=5 // pred_region
        %s327 = ssub.s32 %s16, 1
        %p328 = scmp.lt.s32.totalorder %s26, 1
        %s329 = scalar_select %p328, %s26, 1
        %p330 = scmp.lt.s32.totalorder %s27, 0
        %s331 = scalar_select %p330, %s27, 0
        %s332 = sadd.s32 %s331, %s329
        %s333 = smul.addr %s332, 8
        %s334 = scalar_lea.vmem %s0, %s333
        %p335 = pneg %p63
        %p336 = pneg %p60
        %p337 = scmp.lt.s32.totalorder %s26, 1
        %s338 = scalar_select %p337, %s26, 1
        %s339 = smul.addr %s338, 8
        %s340 = scalar_lea.vmem %s1, %s339
        %p341 = pneg %p89
        %p342 = pneg %p86
        %p343 = scmp.lt.s32.totalorder %s26, 1
        %s344 = scalar_select %p343, %s26, 1
        %s345 = smul.addr %s344, 8
        %s346 = scalar_lea.vmem %s2, %s345
        %p347 = pneg %p115
        %p348 = pneg %p112
        %p349 = scmp.lt.s32.totalorder %s28, 3
        %s350 = scalar_select %p349, %s28, 3
        %s351 = smul.addr %s350, 4
        %s352 = smul.addr %s351, 8
        %s353 = scalar_lea.vmem %s3, %s352
        %p354 = pneg %p141
        %p355 = pneg %p138
        %p356 = scmp.lt.s32.totalorder %s28, 3
        %s357 = scalar_select %p356, %s28, 3
        %s358 = smul.addr %s357, 4
        %s359 = smul.addr %s358, 8
        %s360 = scalar_lea.vmem %s4, %s359
        %p361 = pneg %p167
        %p362 = pneg %p164
        %p363 = scmp.lt.s32.totalorder %s28, 3
        %s364 = scalar_select %p363, %s28, 3
        %s365 = smul.addr %s364, 4
        %s366 = smul.addr %s365, 8
        %s367 = scalar_lea.vmem %s5, %s366
        %p368 = pneg %p193
        %p369 = pneg %p190
        %p370 = scmp.lt.s32.totalorder %s28, 3
        %s371 = scalar_select %p370, %s28, 3
        %s372 = smul.addr %s371, 8
        %s373 = scalar_lea.vmem %s6, %s372
        %p374 = pneg %p219
        %p375 = pneg %p216
        %p376 = pneg %p247
        %p377 = pneg %p244
        %s378 = sand.u32 %s234, 1
        %s379 = scalar_lea.sflag [#allocation4], %s378
        %s380 = sand.u32 %s234, 1
        %s381 = smul.addr %s380, 8
        %s382 = scalar_lea.vmem [#allocation3], %s381
        %p383 = scmp.lt.s32.totalorder %s26, 1
        %s384 = scalar_select %p383, %s26, 1
        %p385 = scmp.lt.s32.totalorder %s27, 0
        %s386 = scalar_select %p385, %s27, 0
        %s387 = sadd.s32 %s386, %s384
        %s388 = smul.addr %s387, 8
        %s389 = scalar_lea.vmem %s0, %s388
        %p390 = scmp.lt.s32.totalorder %s26, 1
        %s391 = scalar_select %p390, %s26, 1
        %s392 = smul.addr %s391, 8
        %s393 = scalar_lea.vmem %s1, %s392
        %p394 = scmp.lt.s32.totalorder %s26, 1
        %s395 = scalar_select %p394, %s26, 1
        %s396 = smul.addr %s395, 8
        %s397 = scalar_lea.vmem %s2, %s396
        %p398 = scmp.lt.s32.totalorder %s28, 3
        %s399 = scalar_select %p398, %s28, 3
        %s400 = smul.addr %s399, 4
        %s401 = smul.addr %s400, 8
        %s402 = scalar_lea.vmem %s3, %s401
        %p403 = scmp.lt.s32.totalorder %s28, 3
        %s404 = scalar_select %p403, %s28, 3
        %s405 = smul.addr %s404, 4
        %s406 = smul.addr %s405, 8
        %s407 = scalar_lea.vmem %s4, %s406
        %p408 = scmp.lt.s32.totalorder %s28, 3
        %s409 = scalar_select %p408, %s28, 3
        %s410 = smul.addr %s409, 4
        %s411 = smul.addr %s410, 8
        %s412 = scalar_lea.vmem %s5, %s411
        %p413 = scmp.lt.s32.totalorder %s28, 3
        %s414 = scalar_select %p413, %s28, 3
        %s415 = smul.addr %s414, 8
        %s416 = scalar_lea.vmem %s6, %s415
        %p417 = scmp.eq.s32.totalorder %s28, 0
        // Predicated region
        $region49: #{tpu_custom_call.1} parent=47 // pred_check
          %p418 = pneg %p417
        $region50: #{tpu_custom_call.1} parent=47 // pred_check_branch
          %420 = sbr.rel (%p418) target = $region52
        $region51: #{tpu_custom_call.1} parent=47 // pred_region
          %421 = vst [vmem:[#allocation2] sm:$0xff] 0.0
        $region52: #{tpu_custom_call.1} parent=47 // pred_fallthru
          _
        %v422 = vld [vmem:[%s389] sm:$0xff]
        %v423 = vld [vmem:[%s393] sm:$0xff]
        %v424 = vld [vmem:[%s397] sm:$0xff]
        %v425 = vld [vmem:[%s402] sm:$0xff]
        %v426 = vld [vmem:[%s402 + $0x8] sm:$0xff]
        %v427 = vld [vmem:[%s402 + $0x10] sm:$0xff]
        %v428 = vld [vmem:[%s402 + $0x18] sm:$0xff]
        %v429 = vld [vmem:[%s407] sm:$0xff]
        %v430 = vld [vmem:[%s407 + $0x8] sm:$0xff]
        %v431 = vld [vmem:[%s407 + $0x10] sm:$0xff]
        %v432 = vld [vmem:[%s407 + $0x18] sm:$0xff]
        %v433 = vld [vmem:[%s412] sm:$0xff]
        %v434 = vld [vmem:[%s412 + $0x8] sm:$0xff]
        %v435 = vld [vmem:[%s412 + $0x10] sm:$0xff]
        %v436 = vld [vmem:[%s412 + $0x18] sm:$0xff]
        %v437 = vld [vmem:[%s416] sm:$0xff]
        %vm438 = vcmask 261120
        %v440 = vsel %vm438, %v422, 0
        %442 = vmatpush.msra.mxu0 0.0
        %443 = vmatpush.msra.mxu0 0.0
        %444 = vmatpush.msra.mxu0 0.0
        %445 = vmatpush.msra.mxu0 0.0
        %446 = vmatpush.msra.mxu0 0.0
        %447 = vmatpush.msra.mxu0 0.0
        %448 = vmatpush.msra.mxu0 0.0
        %449 = vmatpush.msra.mxu0 0.0
        %450 = vmatpush.msra.mxu0 0.0
        %451 = vmatpush.msra.mxu0 0.0
        %452 = vmatpush.msra.mxu0 0.0
        %453 = vmatpush.msra.mxu0 0.0
        %v454 = vand.u32 %v428, 4294901760
        %455 = vmatpush.msra.mxu0 %v454
        %v456 = vand.u32 %v427, 4294901760
        %457 = vmatpush.msra.mxu0 %v456
        %v458 = vand.u32 %v426, 4294901760
        %459 = vmatpush.msra.mxu0 %v458
        %v460 = vand.u32 %v425, 4294901760
        %461 = vmatpush.msra.mxu0 %v460
        %v462 = vand.u32 %v440, 4294901760
        %v463 = vsub.f32 %v440, %v462
        %v464 = vand.u32 %v463, 4294901760
        %v465 = vsub.f32 %v463, %v464
        %v466 = vand.u32 %v465, 4294901760
        %467 = vmatmul.f32.gmra.mxu0 %v466
        %v468 = vpop.f32.mrf.mxu0
        %v469 = vadd.f32 0.0, %v468
        %470 = vdwg.mxu0
        %471 = vmatpush.msra.mxu0 0.0
        %472 = vmatpush.msra.mxu0 0.0
        %473 = vmatpush.msra.mxu0 0.0
        %474 = vmatpush.msra.mxu0 0.0
        %475 = vmatpush.msra.mxu0 0.0
        %476 = vmatpush.msra.mxu0 0.0
        %477 = vmatpush.msra.mxu0 0.0
        %478 = vmatpush.msra.mxu0 0.0
        %479 = vmatpush.msra.mxu0 0.0
        %480 = vmatpush.msra.mxu0 0.0
        %481 = vmatpush.msra.mxu0 0.0
        %482 = vmatpush.msra.mxu0 0.0
        %v483 = vand.u32 %v428, 4294901760
        %v484 = vsub.f32 %v428, %v483
        %v485 = vand.u32 %v484, 4294901760
        %v486 = vsub.f32 %v484, %v485
        %v487 = vand.u32 %v486, 4294901760
        %488 = vmatpush.msra.mxu0 %v487
        %v489 = vand.u32 %v427, 4294901760
        %v490 = vsub.f32 %v427, %v489
        %v491 = vand.u32 %v490, 4294901760
        %v492 = vsub.f32 %v490, %v491
        %v493 = vand.u32 %v492, 4294901760
        %494 = vmatpush.msra.mxu0 %v493
        %v495 = vand.u32 %v426, 4294901760
        %v496 = vsub.f32 %v426, %v495
        %v497 = vand.u32 %v496, 4294901760
        %v498 = vsub.f32 %v496, %v497
        %v499 = vand.u32 %v498, 4294901760
        %500 = vmatpush.msra.mxu0 %v499
        %v501 = vand.u32 %v425, 4294901760
        %v502 = vsub.f32 %v425, %v501
        %v503 = vand.u32 %v502, 4294901760
        %v504 = vsub.f32 %v502, %v503
        %v505 = vand.u32 %v504, 4294901760
        %506 = vmatpush.msra.mxu0 %v505
        %v507 = vand.u32 %v440, 4294901760
        %508 = vmatmul.f32.gmra.mxu0 %v507
        %v509 = vpop.f32.mrf.mxu0
        %v510 = vadd.f32 %v469, %v509
        %511 = vdwg.mxu0
        %512 = vmatpush.msra.mxu0 0.0
        %513 = vmatpush.msra.mxu0 0.0
        %514 = vmatpush.msra.mxu0 0.0
        %515 = vmatpush.msra.mxu0 0.0
        %516 = vmatpush.msra.mxu0 0.0
        %517 = vmatpush.msra.mxu0 0.0
        %518 = vmatpush.msra.mxu0 0.0
        %519 = vmatpush.msra.mxu0 0.0
        %520 = vmatpush.msra.mxu0 0.0
        %521 = vmatpush.msra.mxu0 0.0
        %522 = vmatpush.msra.mxu0 0.0
        %523 = vmatpush.msra.mxu0 0.0
        %v524 = vand.u32 %v428, 4294901760
        %v525 = vsub.f32 %v428, %v524
        %526 = vmatpush.msra.mxu0 %v525
        %v527 = vand.u32 %v427, 4294901760
        %v528 = vsub.f32 %v427, %v527
        %529 = vmatpush.msra.mxu0 %v528
        %v530 = vand.u32 %v426, 4294901760
        %v531 = vsub.f32 %v426, %v530
        %532 = vmatpush.msra.mxu0 %v531
        %v533 = vand.u32 %v425, 4294901760
        %v534 = vsub.f32 %v425, %v533
        %535 = vmatpush.msra.mxu0 %v534
        %v536 = vand.u32 %v440, 4294901760
        %v537 = vsub.f32 %v440, %v536
        %538 = vmatmul.f32.gmra.mxu0 %v537
        %v539 = vpop.f32.mrf.mxu0
        %v540 = vadd.f32 %v510, %v539
        %541 = vdwg.mxu0
        %542 = vmatpush.msra.mxu0 0.0
        %543 = vmatpush.msra.mxu0 0.0
        %544 = vmatpush.msra.mxu0 0.0
        %545 = vmatpush.msra.mxu0 0.0
        %546 = vmatpush.msra.mxu0 0.0
        %547 = vmatpush.msra.mxu0 0.0
        %548 = vmatpush.msra.mxu0 0.0
        %549 = vmatpush.msra.mxu0 0.0
        %550 = vmatpush.msra.mxu0 0.0
        %551 = vmatpush.msra.mxu0 0.0
        %552 = vmatpush.msra.mxu0 0.0
        %553 = vmatpush.msra.mxu0 0.0
        %v554 = vand.u32 %v428, 4294901760
        %555 = vmatpush.msra.mxu0 %v554
        %v556 = vand.u32 %v427, 4294901760
        %557 = vmatpush.msra.mxu0 %v556
        %v558 = vand.u32 %v426, 4294901760
        %559 = vmatpush.msra.mxu0 %v558
        %v560 = vand.u32 %v425, 4294901760
        %561 = vmatpush.msra.mxu0 %v560
        %v562 = vand.u32 %v440, 4294901760
        %v563 = vsub.f32 %v440, %v562
        %v564 = vand.u32 %v563, 4294901760
        %565 = vmatmul.f32.gmra.mxu0 %v564
        %v566 = vpop.f32.mrf.mxu0
        %v567 = vadd.f32 %v540, %v566
        %568 = vdwg.mxu0
        %569 = vmatpush.msra.mxu0 0.0
        %570 = vmatpush.msra.mxu0 0.0
        %571 = vmatpush.msra.mxu0 0.0
        %572 = vmatpush.msra.mxu0 0.0
        %573 = vmatpush.msra.mxu0 0.0
        %574 = vmatpush.msra.mxu0 0.0
        %575 = vmatpush.msra.mxu0 0.0
        %576 = vmatpush.msra.mxu0 0.0
        %577 = vmatpush.msra.mxu0 0.0
        %578 = vmatpush.msra.mxu0 0.0
        %579 = vmatpush.msra.mxu0 0.0
        %580 = vmatpush.msra.mxu0 0.0
        %v581 = vand.u32 %v428, 4294901760
        %v582 = vsub.f32 %v428, %v581
        %v583 = vand.u32 %v582, 4294901760
        %584 = vmatpush.msra.mxu0 %v583
        %v585 = vand.u32 %v427, 4294901760
        %v586 = vsub.f32 %v427, %v585
        %v587 = vand.u32 %v586, 4294901760
        %588 = vmatpush.msra.mxu0 %v587
        %v589 = vand.u32 %v426, 4294901760
        %v590 = vsub.f32 %v426, %v589
        %v591 = vand.u32 %v590, 4294901760
        %592 = vmatpush.msra.mxu0 %v591
        %v593 = vand.u32 %v425, 4294901760
        %v594 = vsub.f32 %v425, %v593
        %v595 = vand.u32 %v594, 4294901760
        %596 = vmatpush.msra.mxu0 %v595
        %v597 = vand.u32 %v440, 4294901760
        %598 = vmatmul.f32.gmra.mxu0 %v597
        %v599 = vpop.f32.mrf.mxu0
        %v600 = vadd.f32 %v567, %v599
        %601 = vdwg.mxu0
        %602 = vmatpush.msra.mxu0 0.0
        %603 = vmatpush.msra.mxu0 0.0
        %604 = vmatpush.msra.mxu0 0.0
        %605 = vmatpush.msra.mxu0 0.0
        %606 = vmatpush.msra.mxu0 0.0
        %607 = vmatpush.msra.mxu0 0.0
        %608 = vmatpush.msra.mxu0 0.0
        %609 = vmatpush.msra.mxu0 0.0
        %610 = vmatpush.msra.mxu0 0.0
        %611 = vmatpush.msra.mxu0 0.0
        %612 = vmatpush.msra.mxu0 0.0
        %613 = vmatpush.msra.mxu0 0.0
        %v614 = vand.u32 %v428, 4294901760
        %615 = vmatpush.msra.mxu0 %v614
        %v616 = vand.u32 %v427, 4294901760
        %617 = vmatpush.msra.mxu0 %v616
        %v618 = vand.u32 %v426, 4294901760
        %619 = vmatpush.msra.mxu0 %v618
        %v620 = vand.u32 %v425, 4294901760
        %621 = vmatpush.msra.mxu0 %v620
        %v622 = vand.u32 %v440, 4294901760
        %623 = vmatmul.f32.gmra.mxu0 %v622
        %v624 = vpop.f32.mrf.mxu0
        %v625 = vadd.f32 %v600, %v624
        %626 = vdwg.mxu0
        %v628 = vsel %vm438, %v423, 0
        %630 = vmatpush.msra.mxu0 0.0
        %631 = vmatpush.msra.mxu0 0.0
        %632 = vmatpush.msra.mxu0 0.0
        %633 = vmatpush.msra.mxu0 0.0
        %634 = vmatpush.msra.mxu0 0.0
        %635 = vmatpush.msra.mxu0 0.0
        %636 = vmatpush.msra.mxu0 0.0
        %637 = vmatpush.msra.mxu0 0.0
        %638 = vmatpush.msra.mxu0 0.0
        %639 = vmatpush.msra.mxu0 0.0
        %640 = vmatpush.msra.mxu0 0.0
        %641 = vmatpush.msra.mxu0 0.0
        %v642 = vand.u32 %v432, 4294901760
        %643 = vmatpush.msra.mxu0 %v642
        %v644 = vand.u32 %v431, 4294901760
        %645 = vmatpush.msra.mxu0 %v644
        %v646 = vand.u32 %v430, 4294901760
        %647 = vmatpush.msra.mxu0 %v646
        %v648 = vand.u32 %v429, 4294901760
        %649 = vmatpush.msra.mxu0 %v648
        %v650 = vand.u32 %v628, 4294901760
        %v651 = vsub.f32 %v628, %v650
        %v652 = vand.u32 %v651, 4294901760
        %v653 = vsub.f32 %v651, %v652
        %v654 = vand.u32 %v653, 4294901760
        %655 = vmatmul.f32.gmra.mxu0 %v654
        %v656 = vpop.f32.mrf.mxu0
        %v657 = vadd.f32 0.0, %v656
        %658 = vdwg.mxu0
        %659 = vmatpush.msra.mxu0 0.0
        %660 = vmatpush.msra.mxu0 0.0
        %661 = vmatpush.msra.mxu0 0.0
        %662 = vmatpush.msra.mxu0 0.0
        %663 = vmatpush.msra.mxu0 0.0
        %664 = vmatpush.msra.mxu0 0.0
        %665 = vmatpush.msra.mxu0 0.0
        %666 = vmatpush.msra.mxu0 0.0
        %667 = vmatpush.msra.mxu0 0.0
        %668 = vmatpush.msra.mxu0 0.0
        %669 = vmatpush.msra.mxu0 0.0
        %670 = vmatpush.msra.mxu0 0.0
        %v671 = vand.u32 %v432, 4294901760
        %v672 = vsub.f32 %v432, %v671
        %v673 = vand.u32 %v672, 4294901760
        %v674 = vsub.f32 %v672, %v673
        %v675 = vand.u32 %v674, 4294901760
        %676 = vmatpush.msra.mxu0 %v675
        %v677 = vand.u32 %v431, 4294901760
        %v678 = vsub.f32 %v431, %v677
        %v679 = vand.u32 %v678, 4294901760
        %v680 = vsub.f32 %v678, %v679
        %v681 = vand.u32 %v680, 4294901760
        %682 = vmatpush.msra.mxu0 %v681
        %v683 = vand.u32 %v430, 4294901760
        %v684 = vsub.f32 %v430, %v683
        %v685 = vand.u32 %v684, 4294901760
        %v686 = vsub.f32 %v684, %v685
        %v687 = vand.u32 %v686, 4294901760
        %688 = vmatpush.msra.mxu0 %v687
        %v689 = vand.u32 %v429, 4294901760
        %v690 = vsub.f32 %v429, %v689
        %v691 = vand.u32 %v690, 4294901760
        %v692 = vsub.f32 %v690, %v691
        %v693 = vand.u32 %v692, 4294901760
        %694 = vmatpush.msra.mxu0 %v693
        %v695 = vand.u32 %v628, 4294901760
        %696 = vmatmul.f32.gmra.mxu0 %v695
        %v697 = vpop.f32.mrf.mxu0
        %v698 = vadd.f32 %v657, %v697
        %699 = vdwg.mxu0
        %700 = vmatpush.msra.mxu0 0.0
        %701 = vmatpush.msra.mxu0 0.0
        %702 = vmatpush.msra.mxu0 0.0
        %703 = vmatpush.msra.mxu0 0.0
        %704 = vmatpush.msra.mxu0 0.0
        %705 = vmatpush.msra.mxu0 0.0
        %706 = vmatpush.msra.mxu0 0.0
        %707 = vmatpush.msra.mxu0 0.0
        %708 = vmatpush.msra.mxu0 0.0
        %709 = vmatpush.msra.mxu0 0.0
        %710 = vmatpush.msra.mxu0 0.0
        %711 = vmatpush.msra.mxu0 0.0
        %v712 = vand.u32 %v432, 4294901760
        %v713 = vsub.f32 %v432, %v712
        %714 = vmatpush.msra.mxu0 %v713
        %v715 = vand.u32 %v431, 4294901760
        %v716 = vsub.f32 %v431, %v715
        %717 = vmatpush.msra.mxu0 %v716
        %v718 = vand.u32 %v430, 4294901760
        %v719 = vsub.f32 %v430, %v718
        %720 = vmatpush.msra.mxu0 %v719
        %v721 = vand.u32 %v429, 4294901760
        %v722 = vsub.f32 %v429, %v721
        %723 = vmatpush.msra.mxu0 %v722
        %v724 = vand.u32 %v628, 4294901760
        %v725 = vsub.f32 %v628, %v724
        %726 = vmatmul.f32.gmra.mxu0 %v725
        %v727 = vpop.f32.mrf.mxu0
        %v728 = vadd.f32 %v698, %v727
        %729 = vdwg.mxu0
        %730 = vmatpush.msra.mxu0 0.0
        %731 = vmatpush.msra.mxu0 0.0
        %732 = vmatpush.msra.mxu0 0.0
        %733 = vmatpush.msra.mxu0 0.0
        %734 = vmatpush.msra.mxu0 0.0
        %735 = vmatpush.msra.mxu0 0.0
        %736 = vmatpush.msra.mxu0 0.0
        %737 = vmatpush.msra.mxu0 0.0
        %738 = vmatpush.msra.mxu0 0.0
        %739 = vmatpush.msra.mxu0 0.0
        %740 = vmatpush.msra.mxu0 0.0
        %741 = vmatpush.msra.mxu0 0.0
        %v742 = vand.u32 %v432, 4294901760
        %743 = vmatpush.msra.mxu0 %v742
        %v744 = vand.u32 %v431, 4294901760
        %745 = vmatpush.msra.mxu0 %v744
        %v746 = vand.u32 %v430, 4294901760
        %747 = vmatpush.msra.mxu0 %v746
        %v748 = vand.u32 %v429, 4294901760
        %749 = vmatpush.msra.mxu0 %v748
        %v750 = vand.u32 %v628, 4294901760
        %v751 = vsub.f32 %v628, %v750
        %v752 = vand.u32 %v751, 4294901760
        %753 = vmatmul.f32.gmra.mxu0 %v752
        %v754 = vpop.f32.mrf.mxu0
        %v755 = vadd.f32 %v728, %v754
        %756 = vdwg.mxu0
        %757 = vmatpush.msra.mxu0 0.0
        %758 = vmatpush.msra.mxu0 0.0
        %759 = vmatpush.msra.mxu0 0.0
        %760 = vmatpush.msra.mxu0 0.0
        %761 = vmatpush.msra.mxu0 0.0
        %762 = vmatpush.msra.mxu0 0.0
        %763 = vmatpush.msra.mxu0 0.0
        %764 = vmatpush.msra.mxu0 0.0
        %765 = vmatpush.msra.mxu0 0.0
        %766 = vmatpush.msra.mxu0 0.0
        %767 = vmatpush.msra.mxu0 0.0
        %768 = vmatpush.msra.mxu0 0.0
        %v769 = vand.u32 %v432, 4294901760
        %v770 = vsub.f32 %v432, %v769
        %v771 = vand.u32 %v770, 4294901760
        %772 = vmatpush.msra.mxu0 %v771
        %v773 = vand.u32 %v431, 4294901760
        %v774 = vsub.f32 %v431, %v773
        %v775 = vand.u32 %v774, 4294901760
        %776 = vmatpush.msra.mxu0 %v775
        %v777 = vand.u32 %v430, 4294901760
        %v778 = vsub.f32 %v430, %v777
        %v779 = vand.u32 %v778, 4294901760
        %780 = vmatpush.msra.mxu0 %v779
        %v781 = vand.u32 %v429, 4294901760
        %v782 = vsub.f32 %v429, %v781
        %v783 = vand.u32 %v782, 4294901760
        %784 = vmatpush.msra.mxu0 %v783
        %v785 = vand.u32 %v628, 4294901760
        %786 = vmatmul.f32.gmra.mxu0 %v785
        %v787 = vpop.f32.mrf.mxu0
        %v788 = vadd.f32 %v755, %v787
        %789 = vdwg.mxu0
        %790 = vmatpush.msra.mxu0 0.0
        %791 = vmatpush.msra.mxu0 0.0
        %792 = vmatpush.msra.mxu0 0.0
        %793 = vmatpush.msra.mxu0 0.0
        %794 = vmatpush.msra.mxu0 0.0
        %795 = vmatpush.msra.mxu0 0.0
        %796 = vmatpush.msra.mxu0 0.0
        %797 = vmatpush.msra.mxu0 0.0
        %798 = vmatpush.msra.mxu0 0.0
        %799 = vmatpush.msra.mxu0 0.0
        %800 = vmatpush.msra.mxu0 0.0
        %801 = vmatpush.msra.mxu0 0.0
        %v802 = vand.u32 %v432, 4294901760
        %803 = vmatpush.msra.mxu0 %v802
        %v804 = vand.u32 %v431, 4294901760
        %805 = vmatpush.msra.mxu0 %v804
        %v806 = vand.u32 %v430, 4294901760
        %807 = vmatpush.msra.mxu0 %v806
        %v808 = vand.u32 %v429, 4294901760
        %809 = vmatpush.msra.mxu0 %v808
        %v810 = vand.u32 %v628, 4294901760
        %811 = vmatmul.f32.gmra.mxu0 %v810
        %v812 = vpop.f32.mrf.mxu0
        %v813 = vadd.f32 %v788, %v812
        %814 = vdwg.mxu0
        %v816 = vsel %vm438, %v424, 0
        %818 = vmatpush.msra.mxu0 0.0
        %819 = vmatpush.msra.mxu0 0.0
        %820 = vmatpush.msra.mxu0 0.0
        %821 = vmatpush.msra.mxu0 0.0
        %822 = vmatpush.msra.mxu0 0.0
        %823 = vmatpush.msra.mxu0 0.0
        %824 = vmatpush.msra.mxu0 0.0
        %825 = vmatpush.msra.mxu0 0.0
        %826 = vmatpush.msra.mxu0 0.0
        %827 = vmatpush.msra.mxu0 0.0
        %828 = vmatpush.msra.mxu0 0.0
        %829 = vmatpush.msra.mxu0 0.0
        %v830 = vand.u32 %v436, 4294901760
        %831 = vmatpush.msra.mxu0 %v830
        %v832 = vand.u32 %v435, 4294901760
        %833 = vmatpush.msra.mxu0 %v832
        %v834 = vand.u32 %v434, 4294901760
        %835 = vmatpush.msra.mxu0 %v834
        %v836 = vand.u32 %v433, 4294901760
        %837 = vmatpush.msra.mxu0 %v836
        %v838 = vand.u32 %v816, 4294901760
        %v839 = vsub.f32 %v816, %v838
        %v840 = vand.u32 %v839, 4294901760
        %v841 = vsub.f32 %v839, %v840
        %v842 = vand.u32 %v841, 4294901760
        %843 = vmatmul.f32.gmra.mxu0 %v842
        %v844 = vpop.f32.mrf.mxu0
        %v845 = vadd.f32 0.0, %v844
        %846 = vdwg.mxu0
        %847 = vmatpush.msra.mxu0 0.0
        %848 = vmatpush.msra.mxu0 0.0
        %849 = vmatpush.msra.mxu0 0.0
        %850 = vmatpush.msra.mxu0 0.0
        %851 = vmatpush.msra.mxu0 0.0
        %852 = vmatpush.msra.mxu0 0.0
        %853 = vmatpush.msra.mxu0 0.0
        %854 = vmatpush.msra.mxu0 0.0
        %855 = vmatpush.msra.mxu0 0.0
        %856 = vmatpush.msra.mxu0 0.0
        %857 = vmatpush.msra.mxu0 0.0
        %858 = vmatpush.msra.mxu0 0.0
        %v859 = vand.u32 %v436, 4294901760
        %v860 = vsub.f32 %v436, %v859
        %v861 = vand.u32 %v860, 4294901760
        %v862 = vsub.f32 %v860, %v861
        %v863 = vand.u32 %v862, 4294901760
        %864 = vmatpush.msra.mxu0 %v863
        %v865 = vand.u32 %v435, 4294901760
        %v866 = vsub.f32 %v435, %v865
        %v867 = vand.u32 %v866, 4294901760
        %v868 = vsub.f32 %v866, %v867
        %v869 = vand.u32 %v868, 4294901760
        %870 = vmatpush.msra.mxu0 %v869
        %v871 = vand.u32 %v434, 4294901760
        %v872 = vsub.f32 %v434, %v871
        %v873 = vand.u32 %v872, 4294901760
        %v874 = vsub.f32 %v872, %v873
        %v875 = vand.u32 %v874, 4294901760
        %876 = vmatpush.msra.mxu0 %v875
        %v877 = vand.u32 %v433, 4294901760
        %v878 = vsub.f32 %v433, %v877
        %v879 = vand.u32 %v878, 4294901760
        %v880 = vsub.f32 %v878, %v879
        %v881 = vand.u32 %v880, 4294901760
        %882 = vmatpush.msra.mxu0 %v881
        %v883 = vand.u32 %v816, 4294901760
        %884 = vmatmul.f32.gmra.mxu0 %v883
        %v885 = vpop.f32.mrf.mxu0
        %v886 = vadd.f32 %v845, %v885
        %887 = vdwg.mxu0
        %888 = vmatpush.msra.mxu0 0.0
        %889 = vmatpush.msra.mxu0 0.0
        %890 = vmatpush.msra.mxu0 0.0
        %891 = vmatpush.msra.mxu0 0.0
        %892 = vmatpush.msra.mxu0 0.0
        %893 = vmatpush.msra.mxu0 0.0
        %894 = vmatpush.msra.mxu0 0.0
        %895 = vmatpush.msra.mxu0 0.0
        %896 = vmatpush.msra.mxu0 0.0
        %897 = vmatpush.msra.mxu0 0.0
        %898 = vmatpush.msra.mxu0 0.0
        %899 = vmatpush.msra.mxu0 0.0
        %v900 = vand.u32 %v436, 4294901760
        %v901 = vsub.f32 %v436, %v900
        %902 = vmatpush.msra.mxu0 %v901
        %v903 = vand.u32 %v435, 4294901760
        %v904 = vsub.f32 %v435, %v903
        %905 = vmatpush.msra.mxu0 %v904
        %v906 = vand.u32 %v434, 4294901760
        %v907 = vsub.f32 %v434, %v906
        %908 = vmatpush.msra.mxu0 %v907
        %v909 = vand.u32 %v433, 4294901760
        %v910 = vsub.f32 %v433, %v909
        %911 = vmatpush.msra.mxu0 %v910
        %v912 = vand.u32 %v816, 4294901760
        %v913 = vsub.f32 %v816, %v912
        %914 = vmatmul.f32.gmra.mxu0 %v913
        %v915 = vpop.f32.mrf.mxu0
        %v916 = vadd.f32 %v886, %v915
        %917 = vdwg.mxu0
        %918 = vmatpush.msra.mxu0 0.0
        %919 = vmatpush.msra.mxu0 0.0
        %920 = vmatpush.msra.mxu0 0.0
        %921 = vmatpush.msra.mxu0 0.0
        %922 = vmatpush.msra.mxu0 0.0
        %923 = vmatpush.msra.mxu0 0.0
        %924 = vmatpush.msra.mxu0 0.0
        %925 = vmatpush.msra.mxu0 0.0
        %926 = vmatpush.msra.mxu0 0.0
        %927 = vmatpush.msra.mxu0 0.0
        %928 = vmatpush.msra.mxu0 0.0
        %929 = vmatpush.msra.mxu0 0.0
        %v930 = vand.u32 %v436, 4294901760
        %931 = vmatpush.msra.mxu0 %v930
        %v932 = vand.u32 %v435, 4294901760
        %933 = vmatpush.msra.mxu0 %v932
        %v934 = vand.u32 %v434, 4294901760
        %935 = vmatpush.msra.mxu0 %v934
        %v936 = vand.u32 %v433, 4294901760
        %937 = vmatpush.msra.mxu0 %v936
        %v938 = vand.u32 %v816, 4294901760
        %v939 = vsub.f32 %v816, %v938
        %v940 = vand.u32 %v939, 4294901760
        %941 = vmatmul.f32.gmra.mxu0 %v940
        %v942 = vpop.f32.mrf.mxu0
        %v943 = vadd.f32 %v916, %v942
        %944 = vdwg.mxu0
        %945 = vmatpush.msra.mxu0 0.0
        %946 = vmatpush.msra.mxu0 0.0
        %947 = vmatpush.msra.mxu0 0.0
        %948 = vmatpush.msra.mxu0 0.0
        %949 = vmatpush.msra.mxu0 0.0
        %950 = vmatpush.msra.mxu0 0.0
        %951 = vmatpush.msra.mxu0 0.0
        %952 = vmatpush.msra.mxu0 0.0
        %953 = vmatpush.msra.mxu0 0.0
        %954 = vmatpush.msra.mxu0 0.0
        %955 = vmatpush.msra.mxu0 0.0
        %956 = vmatpush.msra.mxu0 0.0
        %v957 = vand.u32 %v436, 4294901760
        %v958 = vsub.f32 %v436, %v957
        %v959 = vand.u32 %v958, 4294901760
        %960 = vmatpush.msra.mxu0 %v959
        %v961 = vand.u32 %v435, 4294901760
        %v962 = vsub.f32 %v435, %v961
        %v963 = vand.u32 %v962, 4294901760
        %964 = vmatpush.msra.mxu0 %v963
        %v965 = vand.u32 %v434, 4294901760
        %v966 = vsub.f32 %v434, %v965
        %v967 = vand.u32 %v966, 4294901760
        %968 = vmatpush.msra.mxu0 %v967
        %v969 = vand.u32 %v433, 4294901760
        %v970 = vsub.f32 %v433, %v969
        %v971 = vand.u32 %v970, 4294901760
        %972 = vmatpush.msra.mxu0 %v971
        %v973 = vand.u32 %v816, 4294901760
        %974 = vmatmul.f32.gmra.mxu0 %v973
        %v975 = vpop.f32.mrf.mxu0
        %v976 = vadd.f32 %v943, %v975
        %977 = vdwg.mxu0
        %978 = vmatpush.msra.mxu0 0.0
        %979 = vmatpush.msra.mxu0 0.0
        %980 = vmatpush.msra.mxu0 0.0
        %981 = vmatpush.msra.mxu0 0.0
        %982 = vmatpush.msra.mxu0 0.0
        %983 = vmatpush.msra.mxu0 0.0
        %984 = vmatpush.msra.mxu0 0.0
        %985 = vmatpush.msra.mxu0 0.0
        %986 = vmatpush.msra.mxu0 0.0
        %987 = vmatpush.msra.mxu0 0.0
        %988 = vmatpush.msra.mxu0 0.0
        %989 = vmatpush.msra.mxu0 0.0
        %v990 = vand.u32 %v436, 4294901760
        %991 = vmatpush.msra.mxu0 %v990
        %v992 = vand.u32 %v435, 4294901760
        %993 = vmatpush.msra.mxu0 %v992
        %v994 = vand.u32 %v434, 4294901760
        %995 = vmatpush.msra.mxu0 %v994
        %v996 = vand.u32 %v433, 4294901760
        %997 = vmatpush.msra.mxu0 %v996
        %v998 = vand.u32 %v816, 4294901760
        %999 = vmatmul.f32.gmra.mxu0 %v998
        %v1000 = vpop.f32.mrf.mxu0
        %v1001 = vadd.f32 %v976, %v1000
        %1002 = vdwg.mxu0
        %vm1003 = vcmask 64512
        %v1005 = vsel %vm1003, %v625, 0
        %v1008 = vsel %vm1003, %v813, 0
        %1010 = vmatpush.xpose.msra.mxu0 0.0
        %1011 = vmatpush.xpose.msra.mxu0 0.0
        %1012 = vmatpush.xpose.msra.mxu0 0.0
        %1013 = vmatpush.xpose.msra.mxu0 0.0
        %1014 = vmatpush.xpose.msra.mxu0 0.0
        %1015 = vmatpush.xpose.msra.mxu0 0.0
        %1016 = vmatpush.xpose.msra.mxu0 0.0
        %1017 = vmatpush.xpose.msra.mxu0 0.0
        %1018 = vmatpush.xpose.msra.mxu0 0.0
        %1019 = vmatpush.xpose.msra.mxu0 0.0
        %1020 = vmatpush.xpose.msra.mxu0 0.0
        %1021 = vmatpush.xpose.msra.mxu0 0.0
        %1022 = vmatpush.xpose.msra.mxu0 0.0
        %1023 = vmatpush.xpose.msra.mxu0 0.0
        %1024 = vmatpush.xpose.msra.mxu0 0.0
        %v1025 = vand.u32 %v1008, 4294901760
        %1026 = vmatpush.xpose.msra.mxu0 %v1025
        %v1027 = vand.u32 %v1005, 4294901760
        %v1028 = vsub.f32 %v1005, %v1027
        %v1029 = vand.u32 %v1028, 4294901760
        %v1030 = vsub.f32 %v1028, %v1029
        %v1031 = vand.u32 %v1030, 4294901760
        %1032 = vmatmul.f32.gmra.mxu0 %v1031
        %v1033 = vpop.f32.mrf.mxu0
        %v1034 = vadd.f32 0.0, %v1033
        %1035 = vdwg.mxu0
        %1036 = vmatpush.xpose.msra.mxu0 0.0
        %1037 = vmatpush.xpose.msra.mxu0 0.0
        %1038 = vmatpush.xpose.msra.mxu0 0.0
        %1039 = vmatpush.xpose.msra.mxu0 0.0
        %1040 = vmatpush.xpose.msra.mxu0 0.0
        %1041 = vmatpush.xpose.msra.mxu0 0.0
        %1042 = vmatpush.xpose.msra.mxu0 0.0
        %1043 = vmatpush.xpose.msra.mxu0 0.0
        %1044 = vmatpush.xpose.msra.mxu0 0.0
        %1045 = vmatpush.xpose.msra.mxu0 0.0
        %1046 = vmatpush.xpose.msra.mxu0 0.0
        %1047 = vmatpush.xpose.msra.mxu0 0.0
        %1048 = vmatpush.xpose.msra.mxu0 0.0
        %1049 = vmatpush.xpose.msra.mxu0 0.0
        %1050 = vmatpush.xpose.msra.mxu0 0.0
        %v1051 = vand.u32 %v1008, 4294901760
        %v1052 = vsub.f32 %v1008, %v1051
        %v1053 = vand.u32 %v1052, 4294901760
        %v1054 = vsub.f32 %v1052, %v1053
        %v1055 = vand.u32 %v1054, 4294901760
        %1056 = vmatpush.xpose.msra.mxu0 %v1055
        %v1057 = vand.u32 %v1005, 4294901760
        %1058 = vmatmul.f32.gmra.mxu0 %v1057
        %v1059 = vpop.f32.mrf.mxu0
        %v1060 = vadd.f32 %v1034, %v1059
        %1061 = vdwg.mxu0
        %1062 = vmatpush.xpose.msra.mxu0 0.0
        %1063 = vmatpush.xpose.msra.mxu0 0.0
        %1064 = vmatpush.xpose.msra.mxu0 0.0
        %1065 = vmatpush.xpose.msra.mxu0 0.0
        %1066 = vmatpush.xpose.msra.mxu0 0.0
        %1067 = vmatpush.xpose.msra.mxu0 0.0
        %1068 = vmatpush.xpose.msra.mxu0 0.0
        %1069 = vmatpush.xpose.msra.mxu0 0.0
        %1070 = vmatpush.xpose.msra.mxu0 0.0
        %1071 = vmatpush.xpose.msra.mxu0 0.0
        %1072 = vmatpush.xpose.msra.mxu0 0.0
        %1073 = vmatpush.xpose.msra.mxu0 0.0
        %1074 = vmatpush.xpose.msra.mxu0 0.0
        %1075 = vmatpush.xpose.msra.mxu0 0.0
        %1076 = vmatpush.xpose.msra.mxu0 0.0
        %v1077 = vand.u32 %v1008, 4294901760
        %v1078 = vsub.f32 %v1008, %v1077
        %1079 = vmatpush.xpose.msra.mxu0 %v1078
        %v1080 = vand.u32 %v1005, 4294901760
        %v1081 = vsub.f32 %v1005, %v1080
        %1082 = vmatmul.f32.gmra.mxu0 %v1081
        %v1083 = vpop.f32.mrf.mxu0
        %v1084 = vadd.f32 %v1060, %v1083
        %1085 = vdwg.mxu0
        %1086 = vmatpush.xpose.msra.mxu0 0.0
        %1087 = vmatpush.xpose.msra.mxu0 0.0
        %1088 = vmatpush.xpose.msra.mxu0 0.0
        %1089 = vmatpush.xpose.msra.mxu0 0.0
        %1090 = vmatpush.xpose.msra.mxu0 0.0
        %1091 = vmatpush.xpose.msra.mxu0 0.0
        %1092 = vmatpush.xpose.msra.mxu0 0.0
        %1093 = vmatpush.xpose.msra.mxu0 0.0
        %1094 = vmatpush.xpose.msra.mxu0 0.0
        %1095 = vmatpush.xpose.msra.mxu0 0.0
        %1096 = vmatpush.xpose.msra.mxu0 0.0
        %1097 = vmatpush.xpose.msra.mxu0 0.0
        %1098 = vmatpush.xpose.msra.mxu0 0.0
        %1099 = vmatpush.xpose.msra.mxu0 0.0
        %1100 = vmatpush.xpose.msra.mxu0 0.0
        %v1101 = vand.u32 %v1008, 4294901760
        %1102 = vmatpush.xpose.msra.mxu0 %v1101
        %v1103 = vand.u32 %v1005, 4294901760
        %v1104 = vsub.f32 %v1005, %v1103
        %v1105 = vand.u32 %v1104, 4294901760
        %1106 = vmatmul.f32.gmra.mxu0 %v1105
        %v1107 = vpop.f32.mrf.mxu0
        %v1108 = vadd.f32 %v1084, %v1107
        %1109 = vdwg.mxu0
        %1110 = vmatpush.xpose.msra.mxu0 0.0
        %1111 = vmatpush.xpose.msra.mxu0 0.0
        %1112 = vmatpush.xpose.msra.mxu0 0.0
        %1113 = vmatpush.xpose.msra.mxu0 0.0
        %1114 = vmatpush.xpose.msra.mxu0 0.0
        %1115 = vmatpush.xpose.msra.mxu0 0.0
        %1116 = vmatpush.xpose.msra.mxu0 0.0
        %1117 = vmatpush.xpose.msra.mxu0 0.0
        %1118 = vmatpush.xpose.msra.mxu0 0.0
        %1119 = vmatpush.xpose.msra.mxu0 0.0
        %1120 = vmatpush.xpose.msra.mxu0 0.0
        %1121 = vmatpush.xpose.msra.mxu0 0.0
        %1122 = vmatpush.xpose.msra.mxu0 0.0
        %1123 = vmatpush.xpose.msra.mxu0 0.0
        %1124 = vmatpush.xpose.msra.mxu0 0.0
        %v1125 = vand.u32 %v1008, 4294901760
        %v1126 = vsub.f32 %v1008, %v1125
        %v1127 = vand.u32 %v1126, 4294901760
        %1128 = vmatpush.xpose.msra.mxu0 %v1127
        %v1129 = vand.u32 %v1005, 4294901760
        %1130 = vmatmul.f32.gmra.mxu0 %v1129
        %v1131 = vpop.f32.mrf.mxu0
        %v1132 = vadd.f32 %v1108, %v1131
        %1133 = vdwg.mxu0
        %1134 = vmatpush.xpose.msra.mxu0 0.0
        %1135 = vmatpush.xpose.msra.mxu0 0.0
        %1136 = vmatpush.xpose.msra.mxu0 0.0
        %1137 = vmatpush.xpose.msra.mxu0 0.0
        %1138 = vmatpush.xpose.msra.mxu0 0.0
        %1139 = vmatpush.xpose.msra.mxu0 0.0
        %1140 = vmatpush.xpose.msra.mxu0 0.0
        %1141 = vmatpush.xpose.msra.mxu0 0.0
        %1142 = vmatpush.xpose.msra.mxu0 0.0
        %1143 = vmatpush.xpose.msra.mxu0 0.0
        %1144 = vmatpush.xpose.msra.mxu0 0.0
        %1145 = vmatpush.xpose.msra.mxu0 0.0
        %1146 = vmatpush.xpose.msra.mxu0 0.0
        %1147 = vmatpush.xpose.msra.mxu0 0.0
        %1148 = vmatpush.xpose.msra.mxu0 0.0
        %v1149 = vand.u32 %v1008, 4294901760
        %1150 = vmatpush.xpose.msra.mxu0 %v1149
        %v1151 = vand.u32 %v1005, 4294901760
        %1152 = vmatmul.f32.gmra.mxu0 %v1151
        %v1153 = vpop.f32.mrf.mxu0
        %v1154 = vadd.f32 %v1132, %v1153
        %1155 = vdwg.mxu0
        %v1156 = vmul.f32 %v1154, 0.35355338
        %vm1157 = vcmp.eq.f32.partialorder %v1156, 0.0
        %v1158 = vsel %vm1157, -1e+30, %v1156
        %v1159 = vsel %vm1003, %v1158, -inf
        %1160 = vmax.xlane.f32.xlu0 %v1159
        %v1161 = vpop.xlane.xlu0 %1160
        %v1162 = vsub.f32 %v1158, %v1161
        %v1163 = vmul.f32 %v1162, 1.442695
        %v1164 = vpow.pop %v1163
        %v1165 = vsel %vm1003, %v1164, 0.0
        %1166 = vadd.xlane.f32.xlu0 %v1165
        %v1167 = vpop.xlane.xlu0 %1166
        %v1168 = vrcp.pop %v1167
        %v1169 = vmul.f32 %v1167, %v1168
        %v1170 = vsub.f32 1.0, %v1169
        %v1171 = vmul.f32 %v1168, %v1170
        %v1172 = vadd.f32 %v1168, %v1171
        %vm1173 = vweird.f32 %v1167
        %vm1174 = vweird.f32 %v1168
        %vm1175 = vmor %vm1173, %vm1174
        %v1176 = vsel %vm1175, %v1168, %v1172
        %v1177 = vand.u32 2147483647, %v1167
        %vm1178 = vcmp.eq.f32.partialorder %v1177, 8.507059e+37
        %v1179 = vand.u32 %v1167, 2147483648
        %v1180 = vor.u32 1.1754944e-38, %v1179
        %v1181 = vsel %vm1178, %v1180, %v1176
        %v1182 = vmul.f32 %v1164, %v1181
        %v1184 = vsel %vm1003, %v1182, 0
        %1186 = vmatpush.msra.mxu0 0.0
        %1187 = vmatpush.msra.mxu0 0.0
        %1188 = vmatpush.msra.mxu0 0.0
        %1189 = vmatpush.msra.mxu0 0.0
        %1190 = vmatpush.msra.mxu0 0.0
        %1191 = vmatpush.msra.mxu0 0.0
        %1192 = vmatpush.msra.mxu0 0.0
        %1193 = vmatpush.msra.mxu0 0.0
        %1194 = vmatpush.msra.mxu0 0.0
        %1195 = vmatpush.msra.mxu0 0.0
        %1196 = vmatpush.msra.mxu0 0.0
        %1197 = vmatpush.msra.mxu0 0.0
        %1198 = vmatpush.msra.mxu0 0.0
        %1199 = vmatpush.msra.mxu0 0.0
        %1200 = vmatpush.msra.mxu0 0.0
        %v1201 = vand.u32 %v1001, 4294901760
        %1202 = vmatpush.msra.mxu0 %v1201
        %v1203 = vand.u32 %v1184, 4294901760
        %v1204 = vsub.f32 %v1184, %v1203
        %v1205 = vand.u32 %v1204, 4294901760
        %v1206 = vsub.f32 %v1204, %v1205
        %v1207 = vand.u32 %v1206, 4294901760
        %1208 = vmatmul.f32.gmra.mxu0 %v1207
        %v1209 = vpop.f32.mrf.mxu0
        %v1210 = vadd.f32 0.0, %v1209
        %1211 = vdwg.mxu0
        %1212 = vmatpush.msra.mxu0 0.0
        %1213 = vmatpush.msra.mxu0 0.0
        %1214 = vmatpush.msra.mxu0 0.0
        %1215 = vmatpush.msra.mxu0 0.0
        %1216 = vmatpush.msra.mxu0 0.0
        %1217 = vmatpush.msra.mxu0 0.0
        %1218 = vmatpush.msra.mxu0 0.0
        %1219 = vmatpush.msra.mxu0 0.0
        %1220 = vmatpush.msra.mxu0 0.0
        %1221 = vmatpush.msra.mxu0 0.0
        %1222 = vmatpush.msra.mxu0 0.0
        %1223 = vmatpush.msra.mxu0 0.0
        %1224 = vmatpush.msra.mxu0 0.0
        %1225 = vmatpush.msra.mxu0 0.0
        %1226 = vmatpush.msra.mxu0 0.0
        %v1227 = vand.u32 %v1001, 4294901760
        %v1228 = vsub.f32 %v1001, %v1227
        %v1229 = vand.u32 %v1228, 4294901760
        %v1230 = vsub.f32 %v1228, %v1229
        %v1231 = vand.u32 %v1230, 4294901760
        %1232 = vmatpush.msra.mxu0 %v1231
        %v1233 = vand.u32 %v1184, 4294901760
        %1234 = vmatmul.f32.gmra.mxu0 %v1233
        %v1235 = vpop.f32.mrf.mxu0
        %v1236 = vadd.f32 %v1210, %v1235
        %1237 = vdwg.mxu0
        %1238 = vmatpush.msra.mxu0 0.0
        %1239 = vmatpush.msra.mxu0 0.0
        %1240 = vmatpush.msra.mxu0 0.0
        %1241 = vmatpush.msra.mxu0 0.0
        %1242 = vmatpush.msra.mxu0 0.0
        %1243 = vmatpush.msra.mxu0 0.0
        %1244 = vmatpush.msra.mxu0 0.0
        %1245 = vmatpush.msra.mxu0 0.0
        %1246 = vmatpush.msra.mxu0 0.0
        %1247 = vmatpush.msra.mxu0 0.0
        %1248 = vmatpush.msra.mxu0 0.0
        %1249 = vmatpush.msra.mxu0 0.0
        %1250 = vmatpush.msra.mxu0 0.0
        %1251 = vmatpush.msra.mxu0 0.0
        %1252 = vmatpush.msra.mxu0 0.0
        %v1253 = vand.u32 %v1001, 4294901760
        %v1254 = vsub.f32 %v1001, %v1253
        %1255 = vmatpush.msra.mxu0 %v1254
        %v1256 = vand.u32 %v1184, 4294901760
        %v1257 = vsub.f32 %v1184, %v1256
        %1258 = vmatmul.f32.gmra.mxu0 %v1257
        %v1259 = vpop.f32.mrf.mxu0
        %v1260 = vadd.f32 %v1236, %v1259
        %1261 = vdwg.mxu0
        %1262 = vmatpush.msra.mxu0 0.0
        %1263 = vmatpush.msra.mxu0 0.0
        %1264 = vmatpush.msra.mxu0 0.0
        %1265 = vmatpush.msra.mxu0 0.0
        %1266 = vmatpush.msra.mxu0 0.0
        %1267 = vmatpush.msra.mxu0 0.0
        %1268 = vmatpush.msra.mxu0 0.0
        %1269 = vmatpush.msra.mxu0 0.0
        %1270 = vmatpush.msra.mxu0 0.0
        %1271 = vmatpush.msra.mxu0 0.0
        %1272 = vmatpush.msra.mxu0 0.0
        %1273 = vmatpush.msra.mxu0 0.0
        %1274 = vmatpush.msra.mxu0 0.0
        %1275 = vmatpush.msra.mxu0 0.0
        %1276 = vmatpush.msra.mxu0 0.0
        %v1277 = vand.u32 %v1001, 4294901760
        %1278 = vmatpush.msra.mxu0 %v1277
        %v1279 = vand.u32 %v1184, 4294901760
        %v1280 = vsub.f32 %v1184, %v1279
        %v1281 = vand.u32 %v1280, 4294901760
        %1282 = vmatmul.f32.gmra.mxu0 %v1281
        %v1283 = vpop.f32.mrf.mxu0
        %v1284 = vadd.f32 %v1260, %v1283
        %1285 = vdwg.mxu0
        %1286 = vmatpush.msra.mxu0 0.0
        %1287 = vmatpush.msra.mxu0 0.0
        %1288 = vmatpush.msra.mxu0 0.0
        %1289 = vmatpush.msra.mxu0 0.0
        %1290 = vmatpush.msra.mxu0 0.0
        %1291 = vmatpush.msra.mxu0 0.0
        %1292 = vmatpush.msra.mxu0 0.0
        %1293 = vmatpush.msra.mxu0 0.0
        %1294 = vmatpush.msra.mxu0 0.0
        %1295 = vmatpush.msra.mxu0 0.0
        %1296 = vmatpush.msra.mxu0 0.0
        %1297 = vmatpush.msra.mxu0 0.0
        %1298 = vmatpush.msra.mxu0 0.0
        %1299 = vmatpush.msra.mxu0 0.0
        %1300 = vmatpush.msra.mxu0 0.0
        %v1301 = vand.u32 %v1001, 4294901760
        %v1302 = vsub.f32 %v1001, %v1301
        %v1303 = vand.u32 %v1302, 4294901760
        %1304 = vmatpush.msra.mxu0 %v1303
        %v1305 = vand.u32 %v1184, 4294901760
        %1306 = vmatmul.f32.gmra.mxu0 %v1305
        %v1307 = vpop.f32.mrf.mxu0
        %v1308 = vadd.f32 %v1284, %v1307
        %1309 = vdwg.mxu0
        %1310 = vmatpush.msra.mxu0 0.0
        %1311 = vmatpush.msra.mxu0 0.0
        %1312 = vmatpush.msra.mxu0 0.0
        %1313 = vmatpush.msra.mxu0 0.0
        %1314 = vmatpush.msra.mxu0 0.0
        %1315 = vmatpush.msra.mxu0 0.0
        %1316 = vmatpush.msra.mxu0 0.0
        %1317 = vmatpush.msra.mxu0 0.0
        %1318 = vmatpush.msra.mxu0 0.0
        %1319 = vmatpush.msra.mxu0 0.0
        %1320 = vmatpush.msra.mxu0 0.0
        %1321 = vmatpush.msra.mxu0 0.0
        %1322 = vmatpush.msra.mxu0 0.0
        %1323 = vmatpush.msra.mxu0 0.0
        %1324 = vmatpush.msra.mxu0 0.0
        %v1325 = vand.u32 %v1001, 4294901760
        %1326 = vmatpush.msra.mxu0 %v1325
        %v1327 = vand.u32 %v1184, 4294901760
        %1328 = vmatmul.f32.gmra.mxu0 %v1327
        %v1329 = vpop.f32.mrf.mxu0
        %v1330 = vadd.f32 %v1308, %v1329
        %1331 = vdwg.mxu0
        %v1332 = vld [vmem:[#allocation2] sm:$0xff]
        %v1334 = vsel %vm1003, %v1330, 0
        %1336 = vmatpush.msra.mxu0 0.0
        %1337 = vmatpush.msra.mxu0 0.0
        %1338 = vmatpush.msra.mxu0 0.0
        %1339 = vmatpush.msra.mxu0 0.0
        %1340 = vmatpush.msra.mxu0 0.0
        %1341 = vmatpush.msra.mxu0 0.0
        %1342 = vmatpush.msra.mxu0 0.0
        %1343 = vmatpush.msra.mxu0 0.0
        %1344 = vmatpush.msra.mxu0 0.0
        %1345 = vmatpush.msra.mxu0 0.0
        %1346 = vmatpush.msra.mxu0 0.0
        %1347 = vmatpush.msra.mxu0 0.0
        %1348 = vmatpush.msra.mxu0 0.0
        %1349 = vmatpush.msra.mxu0 0.0
        %1350 = vmatpush.msra.mxu0 0.0
        %v1351 = vand.u32 %v437, 4294901760
        %1352 = vmatpush.msra.mxu0 %v1351
        %v1353 = vand.u32 %v1334, 4294901760
        %v1354 = vsub.f32 %v1334, %v1353
        %v1355 = vand.u32 %v1354, 4294901760
        %v1356 = vsub.f32 %v1354, %v1355
        %v1357 = vand.u32 %v1356, 4294901760
        %1358 = vmatmul.f32.gmra.mxu0 %v1357
        %v1359 = vpop.f32.mrf.mxu0
        %v1360 = vadd.f32 0.0, %v1359
        %1361 = vdwg.mxu0
        %1362 = vmatpush.msra.mxu0 0.0
        %1363 = vmatpush.msra.mxu0 0.0
        %1364 = vmatpush.msra.mxu0 0.0
        %1365 = vmatpush.msra.mxu0 0.0
        %1366 = vmatpush.msra.mxu0 0.0
        %1367 = vmatpush.msra.mxu0 0.0
        %1368 = vmatpush.msra.mxu0 0.0
        %1369 = vmatpush.msra.mxu0 0.0
        %1370 = vmatpush.msra.mxu0 0.0
        %1371 = vmatpush.msra.mxu0 0.0
        %1372 = vmatpush.msra.mxu0 0.0
        %1373 = vmatpush.msra.mxu0 0.0
        %1374 = vmatpush.msra.mxu0 0.0
        %1375 = vmatpush.msra.mxu0 0.0
        %1376 = vmatpush.msra.mxu0 0.0
        %v1377 = vand.u32 %v437, 4294901760
        %v1378 = vsub.f32 %v437, %v1377
        %v1379 = vand.u32 %v1378, 4294901760
        %v1380 = vsub.f32 %v1378, %v1379
        %v1381 = vand.u32 %v1380, 4294901760
        %1382 = vmatpush.msra.mxu0 %v1381
        %v1383 = vand.u32 %v1334, 4294901760
        %1384 = vmatmul.f32.gmra.mxu0 %v1383
        %v1385 = vpop.f32.mrf.mxu0
        %v1386 = vadd.f32 %v1360, %v1385
        %1387 = vdwg.mxu0
        %1388 = vmatpush.msra.mxu0 0.0
        %1389 = vmatpush.msra.mxu0 0.0
        %1390 = vmatpush.msra.mxu0 0.0
        %1391 = vmatpush.msra.mxu0 0.0
        %1392 = vmatpush.msra.mxu0 0.0
        %1393 = vmatpush.msra.mxu0 0.0
        %1394 = vmatpush.msra.mxu0 0.0
        %1395 = vmatpush.msra.mxu0 0.0
        %1396 = vmatpush.msra.mxu0 0.0
        %1397 = vmatpush.msra.mxu0 0.0
        %1398 = vmatpush.msra.mxu0 0.0
        %1399 = vmatpush.msra.mxu0 0.0
        %1400 = vmatpush.msra.mxu0 0.0
        %1401 = vmatpush.msra.mxu0 0.0
        %1402 = vmatpush.msra.mxu0 0.0
        %v1403 = vand.u32 %v437, 4294901760
        %v1404 = vsub.f32 %v437, %v1403
        %1405 = vmatpush.msra.mxu0 %v1404
        %v1406 = vand.u32 %v1334, 4294901760
        %v1407 = vsub.f32 %v1334, %v1406
        %1408 = vmatmul.f32.gmra.mxu0 %v1407
        %v1409 = vpop.f32.mrf.mxu0
        %v1410 = vadd.f32 %v1386, %v1409
        %1411 = vdwg.mxu0
        %1412 = vmatpush.msra.mxu0 0.0
        %1413 = vmatpush.msra.mxu0 0.0
        %1414 = vmatpush.msra.mxu0 0.0
        %1415 = vmatpush.msra.mxu0 0.0
        %1416 = vmatpush.msra.mxu0 0.0
        %1417 = vmatpush.msra.mxu0 0.0
        %1418 = vmatpush.msra.mxu0 0.0
        %1419 = vmatpush.msra.mxu0 0.0
        %1420 = vmatpush.msra.mxu0 0.0
        %1421 = vmatpush.msra.mxu0 0.0
        %1422 = vmatpush.msra.mxu0 0.0
        %1423 = vmatpush.msra.mxu0 0.0
        %1424 = vmatpush.msra.mxu0 0.0
        %1425 = vmatpush.msra.mxu0 0.0
        %1426 = vmatpush.msra.mxu0 0.0
        %v1427 = vand.u32 %v437, 4294901760
        %1428 = vmatpush.msra.mxu0 %v1427
        %v1429 = vand.u32 %v1334, 4294901760
        %v1430 = vsub.f32 %v1334, %v1429
        %v1431 = vand.u32 %v1430, 4294901760
        %1432 = vmatmul.f32.gmra.mxu0 %v1431
        %v1433 = vpop.f32.mrf.mxu0
        %v1434 = vadd.f32 %v1410, %v1433
        %1435 = vdwg.mxu0
        %1436 = vmatpush.msra.mxu0 0.0
        %1437 = vmatpush.msra.mxu0 0.0
        %1438 = vmatpush.msra.mxu0 0.0
        %1439 = vmatpush.msra.mxu0 0.0
        %1440 = vmatpush.msra.mxu0 0.0
        %1441 = vmatpush.msra.mxu0 0.0
        %1442 = vmatpush.msra.mxu0 0.0
        %1443 = vmatpush.msra.mxu0 0.0
        %1444 = vmatpush.msra.mxu0 0.0
        %1445 = vmatpush.msra.mxu0 0.0
        %1446 = vmatpush.msra.mxu0 0.0
        %1447 = vmatpush.msra.mxu0 0.0
        %1448 = vmatpush.msra.mxu0 0.0
        %1449 = vmatpush.msra.mxu0 0.0
        %1450 = vmatpush.msra.mxu0 0.0
        %v1451 = vand.u32 %v437, 4294901760
        %v1452 = vsub.f32 %v437, %v1451
        %v1453 = vand.u32 %v1452, 4294901760
        %1454 = vmatpush.msra.mxu0 %v1453
        %v1455 = vand.u32 %v1334, 4294901760
        %1456 = vmatmul.f32.gmra.mxu0 %v1455
        %v1457 = vpop.f32.mrf.mxu0
        %v1458 = vadd.f32 %v1434, %v1457
        %1459 = vdwg.mxu0
        %1460 = vmatpush.msra.mxu0 0.0
        %1461 = vmatpush.msra.mxu0 0.0
        %1462 = vmatpush.msra.mxu0 0.0
        %1463 = vmatpush.msra.mxu0 0.0
        %1464 = vmatpush.msra.mxu0 0.0
        %1465 = vmatpush.msra.mxu0 0.0
        %1466 = vmatpush.msra.mxu0 0.0
        %1467 = vmatpush.msra.mxu0 0.0
        %1468 = vmatpush.msra.mxu0 0.0
        %1469 = vmatpush.msra.mxu0 0.0
        %1470 = vmatpush.msra.mxu0 0.0
        %1471 = vmatpush.msra.mxu0 0.0
        %1472 = vmatpush.msra.mxu0 0.0
        %1473 = vmatpush.msra.mxu0 0.0
        %1474 = vmatpush.msra.mxu0 0.0
        %v1475 = vand.u32 %v437, 4294901760
        %1476 = vmatpush.msra.mxu0 %v1475
        %v1477 = vand.u32 %v1334, 4294901760
        %1478 = vmatmul.f32.gmra.mxu0 %v1477
        %v1479 = vpop.f32.mrf.mxu0
        %v1480 = vadd.f32 %v1458, %v1479
        %1481 = vdwg.mxu0
        %v1482 = vadd.f32 %v1332, %v1480
        %1483 = vst [vmem:[#allocation2] sm:$0xff] %v1482
        %p1484 = scmp.eq.s32.totalorder %s28, 3
        // Predicated region
        $region53: #{tpu_custom_call.1} parent=47 // pred_check
          %p1485 = pneg %p1484
        $region54: #{tpu_custom_call.1} parent=47 // pred_check_branch
          %1487 = sbr.rel (%p1485) target = $region56
        $region55: #{tpu_custom_call.1} parent=47 // pred_region
          %v1488 = vld [vmem:[#allocation2] sm:$0xff]
          %1489 = vst [vmem:[%s382] sm:$0xff] %v1488
        $region56: #{tpu_custom_call.1} parent=47 // pred_fallthru
          _
        %s1490 = sand.u32 %s234, 1
        %s1491 = scalar_lea.sflag [#allocation4], %s1490
        %s1492 = sand.u32 %s234, 1
        %s1493 = smul.addr %s1492, 8
        %s1494 = scalar_lea.vmem [#allocation3], %s1493
        // Predicated region
        $region57: #{tpu_custom_call.1} parent=47 // pred_check
          %p1495 = pneg %p244
        $region58: #{tpu_custom_call.1} parent=47 // pred_check_branch
          %1497 = sbr.rel (%p1495) target = $region60
        $region59: #{tpu_custom_call.1} parent=47 // pred_region
          %1499 = vsyncadd %s1491, 0
          %s1500 = sadd.s32 %s27, %s26
          %s1501 = smul.addr %s1500, 8
          %s1502 = scalar_lea.hbm %s7, %s1501
          %s1504 = sshll.u32 %s1494, 4
          %s1505 = int_to_ptr.vmem [resolvable:$true] %s1504
          %s1506 = sshll.u32 %s1502, 4
          %s1507 = int_to_ptr.hbm [resolvable:$true] %s1506
          %1509 = dma.vmem_to_hbm [thread:$0]  %s1505, 128, %s1507, %s1491
        $region60: #{tpu_custom_call.1} parent=47 // pred_fallthru
          _
      $region48: #{tpu_custom_call.1} parent=5 // pred_fallthru
        _
      %p1510 = scmp.le.s32.totalorder 2, %s16
      // Predicated region
      $region61: #{tpu_custom_call.1} parent=5 // pred_check
        %p1511 = pneg %p1510
      $region62: #{tpu_custom_call.1} parent=5 // pred_check_branch
        %1513 = sbr.rel (%p1511) target = $region64
      $region63: #{tpu_custom_call.1} parent=5 // pred_region
        %s1514 = ssub.s32 %s16, 2
        // Predicated region
        $region65: #{tpu_custom_call.1} parent=63 // pred_check
          %p1515 = pneg %p250
        $region66: #{tpu_custom_call.1} parent=63 // pred_check_branch
          %1517 = sbr.rel (%p1515) target = $region68
        $region67: #{tpu_custom_call.1} parent=63 // pred_region
          %s1518 = sand.u32 %s235, 1
          %s1519 = scalar_lea.sflag [#allocation4], %s1518
          %s1520 = sand.u32 %s235, 1
          %s1521 = smul.addr %s1520, 8
          %s1522 = scalar_lea.vmem [#allocation3], %s1521
          %1524 = dma.done %s1519, 128
        $region68: #{tpu_custom_call.1} parent=63 // pred_fallthru
          _
      $region64: #{tpu_custom_call.1} parent=5 // pred_fallthru
        _
    $region6: #{tpu_custom_call.1} parent=1 // loop_footer
      %s20 = sadd.s32 1, %s16
    $region7: #{tpu_custom_call.1} parent=1 // loop_footer_branch
      %15 = sbr.rel target = $region3
    $region8: #{tpu_custom_call.1} parent=1 // loop_exit
      _
    %1525 = vsyncpa [#allocation4], 1
    %s1526 = scalar_lea.sflag [#allocation4], 1
    %1527 = vsyncpa %s1526, 1

</llo_original>
